<compile_context>
chip_gen: v5e
topology: v5e:2x2
jax: 0.10.0
libtpu: 0.0.40
codegen_flags: <defaults>
</compile_context>

<pallas_src>
import functools

import jax
import jax.numpy as jnp
from jax.experimental import pallas as pl
from jax.experimental.pallas import tpu as pltpu

NEG_INF = -1e30


# --------------------------- Fused Pallas kernel ----------------------------

def _fused_gnn_kernel(x_ref, adj_ref, assign_ref, slab_ref, out_ref, *,
                      layout, num_layers, heads, hidden, neg_slope):
    """One grid step = one block-diagonal super-graph.

    x_ref:      [1, Nb, F_in]   node features of this super-graph
    adj_ref:    [1, Nb, Nb]     message mask (adj[dst, src], self-loops included)
    assign_ref: [1, Gb, Nb]     mean-pool matrix (1/count folded in)
    slab_ref:   [R, 128]        all parameters, packed (constant index_map -> resident)
    out_ref:    [1, Gb, C]      per-graph log-probs
    """
    f32 = jnp.float32

    def getp(name):
        off, r, c = layout[name]          # static python ints -> free static slice
        return slab_ref[off:off + r, 0:c]

    x = x_ref[0]                          # [Nb, F_in]
    adj = adj_ref[0]                      # [Nb, Nb]

    # ---- front MLP: relu(lin1) -> relu(lin2) ----
    h = jnp.dot(x, getp('lin1_w'), preferred_element_type=f32) + getp('lin1_b')
    h = jnp.maximum(h, 0.0)
    h = jnp.dot(h, getp('lin2_w'), preferred_element_type=f32) + getp('lin2_b')
    h = jnp.maximum(h, 0.0)
    # TODO(synk): training-mode dropout (RNG mask) not implemented; eval -> identity.

    hh = heads * hidden
    for l in range(num_layers):
        w_all = getp(f'conv{l}_w')        # [fin, hh + 2*heads]: [W | a_dst proj | a_src proj]
        ss = getp(f'conv{l}_ss')          # [2, hh]: row0 = scale, row1 = shift (bias+BN folded)

        # One MXU matmul gives all per-head projections AND both attention-score columns.
        y = jnp.dot(h, w_all, preferred_element_type=f32)            # [Nb, hh + 2*heads]

        # The only cross-lane shuffle per layer: put per-node source scores on the lane axis.
        scores_t = jnp.transpose(y[:, hh:hh + 2 * heads])             # [2*heads, Nb]

        outs = []
        for ho in range(heads):
            xp = y[:, ho * hidden:(ho + 1) * hidden]                  # [Nb, hidden]
            s_dst = y[:, hh + ho:hh + ho + 1]                         # [Nb, 1]
            s_src = scores_t[heads + ho:heads + ho + 1, :]            # [1, Nb]
            e = s_dst + s_src                                         # e[i, j] = a_dst.Wx_i + a_src.Wx_j
            e = jnp.where(e > 0, e, neg_slope * e)                    # LeakyReLU(0.2)
            e = jnp.where(adj > 0, e, NEG_INF)                        # mask non-edges
            m = jnp.max(e, axis=-1, keepdims=True)
            p = jnp.exp(e - m)
            alpha = p / jnp.sum(p, axis=-1, keepdims=True)            # exact softmax (parity)
            outs.append(jnp.dot(alpha, xp, preferred_element_type=f32))   # [Nb, hidden]

        h = jnp.concatenate(outs, axis=-1)                            # [Nb, hh]  (48 lanes -> cheap)
        h = h * ss[0:1, :] + ss[1:2, :]                               # folded GAT bias + eval BN

    # ---- global mean pool + relu(lin3) ----
    pooled = jnp.dot(assign_ref[0], h, preferred_element_type=f32)    # [Gb, hh]
    h3 = jnp.dot(pooled, getp('lin3_w'), preferred_element_type=f32) + getp('lin3_b')
    h3 = jnp.maximum(h3, 0.0)
    # TODO(synk): dropout eval -> identity.

    # ---- lin4 + log_softmax ----
    logits = jnp.dot(h3, getp('lin4_w'), preferred_element_type=f32) + getp('lin4_b')
    m = jnp.max(logits, axis=-1, keepdims=True)
    z = logits - m
    out_ref[0] = z - jnp.log(jnp.sum(jnp.exp(z), axis=-1, keepdims=True))


# --------------------------- Parameter preparation --------------------------

def _fold_conv_params(conv, hidden, heads, bn_eps):
    """Build the fused projection matrix and the folded (bias + eval-BN) scale/shift."""
    w = conv['w']                                            # [fin, heads*hidden]
    dst_cols, src_cols = [], []
    for h in range(heads):
        w_h = w[:, h * hidden:(h + 1) * hidden]              # [fin, hidden]
        dst_cols.append(w_h @ conv['a_dst'][h])              # [fin]
        src_cols.append(w_h @ conv['a_src'][h])              # [fin]
    w_all = jnp.concatenate(
        [w, jnp.stack(dst_cols, axis=1), jnp.stack(src_cols, axis=1)], axis=1)
    scale = conv['bn_gamma'] * jax.lax.rsqrt(conv['bn_rvar'] + bn_eps)       # [1, hh]
    shift = (conv['bias'] - conv['bn_rmean']) * scale + conv['bn_beta']      # [1, hh]
    ss = jnp.concatenate([scale, shift], axis=0)                             # [2, hh]
    return w_all, ss


def _pack_slab(named_params, lane_width=128):
    """Pack a list of (name, 2D array) into one f32 slab; 8-row aligned offsets."""
    layout, row = {}, 0
    for name, p in named_params:
        layout[name] = (row, p.shape[0], p.shape[1])
        row += ((p.shape[0] + 7) // 8) * 8
    slab = jnp.zeros((max(row, 8), lane_width), jnp.float32)
    for name, p in named_params:
        off = layout[name][0]
        slab = slab.at[off:off + p.shape[0], :p.shape[1]].set(p.astype(jnp.float32))
    return slab, layout


# ------------------------------ Model glue ----------------------------------

def init_params(key, node_embedding, hidden, heads, num_classes, num_layers):
    def dense(k, fin, fout, scale=0.1):
        kw, kb = jax.random.split(k)
        return (scale * jax.random.normal(kw, (fin, fout), jnp.float32),
                scale * jax.random.normal(kb, (1, fout), jnp.float32))

    keys = jax.random.split(key, 4 + num_layers)
    p = {}
    p['lin1_w'], p['lin1_b'] = dense(keys[0], node_embedding, 2 * hidden)
    p['lin2_w'], p['lin2_b'] = dense(keys[1], 2 * hidden, hidden)

    convs = []
    for l in range(num_layers):
        fin = hidden if l == 0 else hidden * heads
        kw, ks, kd, kb, kg, kbe, km, kv = jax.random.split(keys[2 + l], 8)
        hh = heads * hidden
        convs.append(dict(
            w=0.1 * jax.random.normal(kw, (fin, hh), jnp.float32),
            a_src=0.1 * jax.random.normal(ks, (heads, hidden), jnp.float32),
            a_dst=0.1 * jax.random.normal(kd, (heads, hidden), jnp.float32),
            bias=0.1 * jax.random.normal(kb, (1, hh), jnp.float32),
            bn_gamma=1.0 + 0.1 * jax.random.normal(kg, (1, hh), jnp.float32),
            bn_beta=0.05 * jax.random.normal(kbe, (1, hh), jnp.float32),
            bn_rmean=0.05 * jax.random.normal(km, (1, hh), jnp.float32),
            bn_rvar=1.0 + 0.1 * jnp.abs(jax.random.normal(kv, (1, hh), jnp.float32)),
        ))
    p['convs'] = convs
    p['lin3_w'], p['lin3_b'] = dense(keys[2 + num_layers], heads * hidden, hidden)
    p['lin4_w'], p['lin4_b'] = dense(keys[3 + num_layers], hidden, num_classes)
    return p


def molecule_gnn_forward(params, x_steps, adj_steps, assign_steps, *,
                         heads, hidden, num_layers, num_classes, bn_eps=1e-5):
    """x_steps [S, Nb, F], adj_steps [S, Nb, Nb], assign_steps [S, Gb, Nb] -> [S*Gb, C]."""
    f32 = jnp.float32
    S, Nb, F_in = x_steps.shape
    Gb = assign_steps.shape[1]

    named = [('lin1_w', params['lin1_w']), ('lin1_b', params['lin1_b']),
             ('lin2_w', params['lin2_w']), ('lin2_b', params['lin2_b'])]
    for l, conv in enumerate(params['convs']):
        w_all, ss = _fold_conv_params(conv, hidden, heads, bn_eps)
        named += [(f'conv{l}_w', w_all), (f'conv{l}_ss', ss)]
    named += [('lin3_w', params['lin3_w']), ('lin3_b', params['lin3_b']),
              ('lin4_w', params['lin4_w']), ('lin4_b', params['lin4_b'])]
    slab, layout = _pack_slab(named)

    kernel = functools.partial(_fused_gnn_kernel, layout=layout,
                               num_layers=num_layers, heads=heads,
                               hidden=hidden, neg_slope=0.2)

    out = pl.pallas_call(
        kernel,
        out_shape=jax.ShapeDtypeStruct((S, Gb, num_classes), f32),
        grid=(S,),
        in_specs=[
            pl.BlockSpec((1, Nb, F_in), lambda i: (i, 0, 0)),
            pl.BlockSpec((1, Nb, Nb), lambda i: (i, 0, 0)),
            pl.BlockSpec((1, Gb, Nb), lambda i: (i, 0, 0)),
            pl.BlockSpec(slab.shape, lambda i: (0, 0)),   # constant -> one DMA, VMEM-resident
        ],
        out_specs=pl.BlockSpec((1, Gb, num_classes), lambda i: (i, 0, 0)),
        compiler_params=pltpu.CompilerParams(dimension_semantics=("parallel",)),
    )(x_steps.astype(f32), adj_steps.astype(f32), assign_steps.astype(f32), slab)
    return out.reshape(S * Gb, num_classes)


# --------------------------- Pure-JAX reference ------------------------------

def _reference_forward(params, x_steps, adj_steps, assign_steps, *,
                       heads, hidden, bn_eps=1e-5):
    def one_step(x, adj, assign):
        h = jax.nn.relu(x @ params['lin1_w'] + params['lin1_b'])
        h = jax.nn.relu(h @ params['lin2_w'] + params['lin2_b'])
        for conv in params['convs']:
            outs = []
            for hd in range(heads):
                w_h = conv['w'][:, hd * hidden:(hd + 1) * hidden]
                xp = h @ w_h
                d = xp @ conv['a_dst'][hd]
                s = xp @ conv['a_src'][hd]
                e = d[:, None] + s[None, :]
                e = jnp.where(e > 0, e, 0.2 * e)
                e = jnp.where(adj > 0, e, NEG_INF)
                a = jax.nn.softmax(e, axis=-1)
                outs.append(a @ xp)
            o = jnp.concatenate(outs, axis=-1) + conv['bias']
            scale = conv['bn_gamma'] * jax.lax.rsqrt(conv['bn_rvar'] + bn_eps)
            h = (o - conv['bn_rmean']) * scale + conv['bn_beta']
        pooled = assign @ h
        h3 = jax.nn.relu(pooled @ params['lin3_w'] + params['lin3_b'])
        logits = h3 @ params['lin4_w'] + params['lin4_b']
        return jax.nn.log_softmax(logits, axis=-1)

    out = jax.vmap(one_step)(x_steps, adj_steps, assign_steps)
    return out.reshape(-1, out.shape[-1])


# ------------------------------- Main ---------------------------------------

if __name__ == "__main__":
    model_params = dict(node_embedding=8, edge_embedding=4, num_classes=4,
                        num_layers=3, hidden_channels=16, dropout=0.2, heads=3)

    NODES_PER_GRAPH = 8      # 8-node ring molecules
    GRAPHS_PER_STEP = 2      # molecules packed into one block-diagonal super-graph
    NUM_STEPS = 4            # grid length (total 8 graphs, 64 nodes)
    Nb = NODES_PER_GRAPH * GRAPHS_PER_STEP
    G_total = NUM_STEPS * GRAPHS_PER_STEP

    key = jax.random.PRNGKey(0)
    k_x, k_p = jax.random.split(key)

    # Node features for all graphs, split into per-step blocks.
    x = jax.random.normal(k_x, (NUM_STEPS * Nb, model_params['node_embedding']), jnp.float32)
    x_steps = x.reshape(NUM_STEPS, Nb, -1)

    # One undirected 8-ring adjacency with self loops; block-diagonal super-graph per step.
    idx = jnp.arange(NODES_PER_GRAPH)
    ring = jnp.zeros((NODES_PER_GRAPH, NODES_PER_GRAPH), jnp.float32)
    ring = ring.at[idx, (idx + 1) % NODES_PER_GRAPH].set(1.0)
    ring = ring.at[(idx + 1) % NODES_PER_GRAPH, idx].set(1.0)
    ring = ring.at[idx, idx].set(1.0)
    adj_step = jnp.kron(jnp.eye(GRAPHS_PER_STEP, dtype=jnp.float32), ring)          # [Nb, Nb]
    adj_steps = jnp.tile(adj_step[None], (NUM_STEPS, 1, 1))

    # Mean-pool assignment per step with 1/count folded in: [Gb, Nb].
    assign_step = jnp.kron(jnp.eye(GRAPHS_PER_STEP, dtype=jnp.float32),
                           jnp.ones((1, NODES_PER_GRAPH), jnp.float32)) / NODES_PER_GRAPH
    assign_steps = jnp.tile(assign_step[None], (NUM_STEPS, 1, 1))

    params = init_params(k_p,
                         model_params['node_embedding'],
                         model_params['hidden_channels'],
                         model_params['heads'],
                         model_params['num_classes'],
                         model_params['num_layers'])

    out = molecule_gnn_forward(params, x_steps, adj_steps, assign_steps,
                               heads=model_params['heads'],
                               hidden=model_params['hidden_channels'],
                               num_layers=model_params['num_layers'],
                               num_classes=model_params['num_classes'])
    out = jax.block_until_ready(out)

    with jax.default_matmul_precision('highest'):
        ref = _reference_forward(params, x_steps, adj_steps, assign_steps,
                                 heads=model_params['heads'],
                                 hidden=model_params['hidden_channels'])
    ref = jax.block_until_ready(ref)

    assert out.shape == (G_total, model_params['num_classes'])
    # log_softmax rows must (exp-)sum to ~1
    assert bool(jnp.all(jnp.abs(jnp.sum(jnp.exp(out), axis=-1) - 1.0) < 1e-4))
    # parity with the pure-JAX eval-mode reference
    assert bool(jnp.allclose(out, ref, atol=2e-3, rtol=2e-3)), "kernel/reference mismatch"
    print("KERNEL_OK")
</pallas_src>

<mosaic_0001>
module attributes {stable_mosaic.version = 11 : i64} {
  func.func @_fused_gnn_kernel(%arg0: i32, %arg1: memref<1x16x8xf32, #tpu.memory_space<vmem>>, %arg2: memref<1x16x16xf32, #tpu.memory_space<vmem>>, %arg3: memref<1x2x16xf32, #tpu.memory_space<vmem>>, %arg4: memref<272x128xf32, #tpu.memory_space<vmem>>, %arg5: memref<1x2x4xf32, #tpu.memory_space<vmem>>) attributes {dimension_semantics = [#tpu.dimension_semantics<parallel>], iteration_bounds = array<i64: 4>, scalar_prefetch = 0 : i64, scratch_operands = 0 : i64, tpu.core_type = #tpu.core_type<tc>, window_params = [{transform_indices = @transform_0, window_bounds = array<i64: 1, 16, 8>}, {transform_indices = @transform_1, window_bounds = array<i64: 1, 16, 16>}, {transform_indices = @transform_2, window_bounds = array<i64: 1, 2, 16>}, {pipeline_mode = #tpu.pipeline_mode<synchronous>, transform_indices = @transform_3, window_bounds = array<i64: 272, 128>}, {transform_indices = @transform_4, window_bounds = array<i64: 1, 2, 4>}]} {
    %c0 = arith.constant 0 : index
    %c0_0 = arith.constant 0 : index
    %c0_1 = arith.constant 0 : index
    %0 = vector.load %arg1[%c0, %c0_0, %c0_1] : memref<1x16x8xf32, #tpu.memory_space<vmem>>, vector<1x16x8xf32>
    %1 = vector.shape_cast %0 : vector<1x16x8xf32> to vector<16x8xf32>
    %c0_2 = arith.constant 0 : index
    %c0_3 = arith.constant 0 : index
    %c0_4 = arith.constant 0 : index
    %2 = vector.load %arg2[%c0_2, %c0_3, %c0_4] : memref<1x16x16xf32, #tpu.memory_space<vmem>>, vector<1x16x16xf32>
    %3 = vector.shape_cast %2 : vector<1x16x16xf32> to vector<16x16xf32>
    %c0_5 = arith.constant 0 : index
    %c0_6 = arith.constant 0 : index
    %4 = vector.load %arg4[%c0_5, %c0_6] : memref<272x128xf32, #tpu.memory_space<vmem>>, vector<8x32xf32>
    %cst = arith.constant dense<0.000000e+00> : vector<16x32xf32>
    %5 = tpu.matmul %1, %4, %cst {dimension_numbers = #tpu.dot_dimension_numbers<[1], [0], [0], [1], [0, 0, 1, 1], [], []>} : vector<16x8xf32>, vector<8x32xf32>, vector<16x32xf32> -> vector<16x32xf32>
    %c8 = arith.constant 8 : index
    %c0_7 = arith.constant 0 : index
    %6 = vector.load %arg4[%c8, %c0_7] : memref<272x128xf32, #tpu.memory_space<vmem>>, vector<1x32xf32>
    %7 = vector.broadcast %6 : vector<1x32xf32> to vector<16x32xf32>
    %8 = arith.addf %5, %7 : vector<16x32xf32>
    %cst_8 = arith.constant 0.000000e+00 : f32
    %9 = vector.broadcast %cst_8 : f32 to vector<16x32xf32>
    %10 = arith.maximumf %8, %9 : vector<16x32xf32>
    %c16 = arith.constant 16 : index
    %c0_9 = arith.constant 0 : index
    %11 = vector.load %arg4[%c16, %c0_9] : memref<272x128xf32, #tpu.memory_space<vmem>>, vector<32x16xf32>
    %cst_10 = arith.constant dense<0.000000e+00> : vector<16x16xf32>
    %12 = tpu.matmul %10, %11, %cst_10 {dimension_numbers = #tpu.dot_dimension_numbers<[1], [0], [0], [1], [0, 0, 1, 1], [], []>} : vector<16x32xf32>, vector<32x16xf32>, vector<16x16xf32> -> vector<16x16xf32>
    %c48 = arith.constant 48 : index
    %c0_11 = arith.constant 0 : index
    %13 = vector.load %arg4[%c48, %c0_11] : memref<272x128xf32, #tpu.memory_space<vmem>>, vector<1x16xf32>
    %14 = vector.broadcast %13 : vector<1x16xf32> to vector<16x16xf32>
    %15 = arith.addf %12, %14 : vector<16x16xf32>
    %cst_12 = arith.constant 0.000000e+00 : f32
    %16 = vector.broadcast %cst_12 : f32 to vector<16x16xf32>
    %17 = arith.maximumf %15, %16 : vector<16x16xf32>
    %c56 = arith.constant 56 : index
    %c0_13 = arith.constant 0 : index
    %18 = vector.load %arg4[%c56, %c0_13] : memref<272x128xf32, #tpu.memory_space<vmem>>, vector<16x54xf32>
    %c72 = arith.constant 72 : index
    %c0_14 = arith.constant 0 : index
    %19 = vector.load %arg4[%c72, %c0_14] : memref<272x128xf32, #tpu.memory_space<vmem>>, vector<2x48xf32>
    %cst_15 = arith.constant dense<0.000000e+00> : vector<16x54xf32>
    %20 = tpu.matmul %17, %18, %cst_15 {dimension_numbers = #tpu.dot_dimension_numbers<[1], [0], [0], [1], [0, 0, 1, 1], [], []>} : vector<16x16xf32>, vector<16x54xf32>, vector<16x54xf32> -> vector<16x54xf32>
    %21 = vector.extract_strided_slice %20 {offsets = [0, 48], sizes = [16, 6], strides = [1, 1]} : vector<16x54xf32> to vector<16x6xf32>
    %22 = tpu.transpose %21, [1, 0] : vector<16x6xf32> -> vector<6x16xf32>
    %23 = vector.extract_strided_slice %20 {offsets = [0, 0], sizes = [16, 16], strides = [1, 1]} : vector<16x54xf32> to vector<16x16xf32>
    %24 = vector.extract_strided_slice %20 {offsets = [0, 48], sizes = [16, 1], strides = [1, 1]} : vector<16x54xf32> to vector<16x1xf32>
    %25 = vector.extract_strided_slice %22 {offsets = [3, 0], sizes = [1, 16], strides = [1, 1]} : vector<6x16xf32> to vector<1x16xf32>
    %26 = vector.broadcast %24 : vector<16x1xf32> to vector<16x16xf32>
    %27 = vector.broadcast %25 : vector<1x16xf32> to vector<16x16xf32>
    %28 = arith.addf %26, %27 : vector<16x16xf32>
    %cst_16 = arith.constant 0.000000e+00 : f32
    %29 = vector.broadcast %cst_16 : f32 to vector<16x16xf32>
    %30 = arith.cmpf ogt, %28, %29 : vector<16x16xf32>
    %cst_17 = arith.constant 2.000000e-01 : f32
    %31 = vector.broadcast %cst_17 : f32 to vector<16x16xf32>
    %32 = arith.mulf %31, %28 : vector<16x16xf32>
    %33 = arith.select %30, %28, %32 : vector<16x16xi1>, vector<16x16xf32>
    %cst_18 = arith.constant 0.000000e+00 : f32
    %34 = vector.broadcast %cst_18 : f32 to vector<16x16xf32>
    %35 = arith.cmpf ogt, %3, %34 : vector<16x16xf32>
    %cst_19 = arith.constant -1.000000e+30 : f32
    %36 = vector.broadcast %cst_19 : f32 to vector<16x16xf32>
    %37 = arith.select %35, %33, %36 : vector<16x16xi1>, vector<16x16xf32>
    %cst_20 = arith.constant dense<0xFF800000> : vector<16xf32>
    %38 = vector.multi_reduction <maximumf>, %37, %cst_20 [1] : vector<16x16xf32> to vector<16xf32>
    %39 = vector.shape_cast %38 : vector<16xf32> to vector<16x1xf32>
    %40 = vector.broadcast %39 : vector<16x1xf32> to vector<16x16xf32>
    %41 = arith.subf %37, %40 : vector<16x16xf32>
    %42 = math.exp %41 : vector<16x16xf32>
    %cst_21 = arith.constant dense<0.000000e+00> : vector<16xf32>
    %43 = vector.multi_reduction <add>, %42, %cst_21 [1] : vector<16x16xf32> to vector<16xf32>
    %44 = vector.shape_cast %43 : vector<16xf32> to vector<16x1xf32>
    %45 = vector.broadcast %44 : vector<16x1xf32> to vector<16x16xf32>
    %46 = arith.divf %42, %45 : vector<16x16xf32>
    %cst_22 = arith.constant dense<0.000000e+00> : vector<16x16xf32>
    %47 = tpu.matmul %46, %23, %cst_22 {dimension_numbers = #tpu.dot_dimension_numbers<[1], [0], [0], [1], [0, 0, 1, 1], [], []>} : vector<16x16xf32>, vector<16x16xf32>, vector<16x16xf32> -> vector<16x16xf32>
    %48 = vector.extract_strided_slice %20 {offsets = [0, 16], sizes = [16, 16], strides = [1, 1]} : vector<16x54xf32> to vector<16x16xf32>
    %49 = vector.extract_strided_slice %20 {offsets = [0, 49], sizes = [16, 1], strides = [1, 1]} : vector<16x54xf32> to vector<16x1xf32>
    %50 = vector.extract_strided_slice %22 {offsets = [4, 0], sizes = [1, 16], strides = [1, 1]} : vector<6x16xf32> to vector<1x16xf32>
    %51 = vector.broadcast %49 : vector<16x1xf32> to vector<16x16xf32>
    %52 = vector.broadcast %50 : vector<1x16xf32> to vector<16x16xf32>
    %53 = arith.addf %51, %52 : vector<16x16xf32>
    %cst_23 = arith.constant 0.000000e+00 : f32
    %54 = vector.broadcast %cst_23 : f32 to vector<16x16xf32>
    %55 = arith.cmpf ogt, %53, %54 : vector<16x16xf32>
    %cst_24 = arith.constant 2.000000e-01 : f32
    %56 = vector.broadcast %cst_24 : f32 to vector<16x16xf32>
    %57 = arith.mulf %56, %53 : vector<16x16xf32>
    %58 = arith.select %55, %53, %57 : vector<16x16xi1>, vector<16x16xf32>
    %cst_25 = arith.constant 0.000000e+00 : f32
    %59 = vector.broadcast %cst_25 : f32 to vector<16x16xf32>
    %60 = arith.cmpf ogt, %3, %59 : vector<16x16xf32>
    %cst_26 = arith.constant -1.000000e+30 : f32
    %61 = vector.broadcast %cst_26 : f32 to vector<16x16xf32>
    %62 = arith.select %60, %58, %61 : vector<16x16xi1>, vector<16x16xf32>
    %cst_27 = arith.constant dense<0xFF800000> : vector<16xf32>
    %63 = vector.multi_reduction <maximumf>, %62, %cst_27 [1] : vector<16x16xf32> to vector<16xf32>
    %64 = vector.shape_cast %63 : vector<16xf32> to vector<16x1xf32>
    %65 = vector.broadcast %64 : vector<16x1xf32> to vector<16x16xf32>
    %66 = arith.subf %62, %65 : vector<16x16xf32>
    %67 = math.exp %66 : vector<16x16xf32>
    %cst_28 = arith.constant dense<0.000000e+00> : vector<16xf32>
    %68 = vector.multi_reduction <add>, %67, %cst_28 [1] : vector<16x16xf32> to vector<16xf32>
    %69 = vector.shape_cast %68 : vector<16xf32> to vector<16x1xf32>
    %70 = vector.broadcast %69 : vector<16x1xf32> to vector<16x16xf32>
    %71 = arith.divf %67, %70 : vector<16x16xf32>
    %cst_29 = arith.constant dense<0.000000e+00> : vector<16x16xf32>
    %72 = tpu.matmul %71, %48, %cst_29 {dimension_numbers = #tpu.dot_dimension_numbers<[1], [0], [0], [1], [0, 0, 1, 1], [], []>} : vector<16x16xf32>, vector<16x16xf32>, vector<16x16xf32> -> vector<16x16xf32>
    %73 = vector.extract_strided_slice %20 {offsets = [0, 32], sizes = [16, 16], strides = [1, 1]} : vector<16x54xf32> to vector<16x16xf32>
    %74 = vector.extract_strided_slice %20 {offsets = [0, 50], sizes = [16, 1], strides = [1, 1]} : vector<16x54xf32> to vector<16x1xf32>
    %75 = vector.extract_strided_slice %22 {offsets = [5, 0], sizes = [1, 16], strides = [1, 1]} : vector<6x16xf32> to vector<1x16xf32>
    %76 = vector.broadcast %74 : vector<16x1xf32> to vector<16x16xf32>
    %77 = vector.broadcast %75 : vector<1x16xf32> to vector<16x16xf32>
    %78 = arith.addf %76, %77 : vector<16x16xf32>
    %cst_30 = arith.constant 0.000000e+00 : f32
    %79 = vector.broadcast %cst_30 : f32 to vector<16x16xf32>
    %80 = arith.cmpf ogt, %78, %79 : vector<16x16xf32>
    %cst_31 = arith.constant 2.000000e-01 : f32
    %81 = vector.broadcast %cst_31 : f32 to vector<16x16xf32>
    %82 = arith.mulf %81, %78 : vector<16x16xf32>
    %83 = arith.select %80, %78, %82 : vector<16x16xi1>, vector<16x16xf32>
    %cst_32 = arith.constant 0.000000e+00 : f32
    %84 = vector.broadcast %cst_32 : f32 to vector<16x16xf32>
    %85 = arith.cmpf ogt, %3, %84 : vector<16x16xf32>
    %cst_33 = arith.constant -1.000000e+30 : f32
    %86 = vector.broadcast %cst_33 : f32 to vector<16x16xf32>
    %87 = arith.select %85, %83, %86 : vector<16x16xi1>, vector<16x16xf32>
    %cst_34 = arith.constant dense<0xFF800000> : vector<16xf32>
    %88 = vector.multi_reduction <maximumf>, %87, %cst_34 [1] : vector<16x16xf32> to vector<16xf32>
    %89 = vector.shape_cast %88 : vector<16xf32> to vector<16x1xf32>
    %90 = vector.broadcast %89 : vector<16x1xf32> to vector<16x16xf32>
    %91 = arith.subf %87, %90 : vector<16x16xf32>
    %92 = math.exp %91 : vector<16x16xf32>
    %cst_35 = arith.constant dense<0.000000e+00> : vector<16xf32>
    %93 = vector.multi_reduction <add>, %92, %cst_35 [1] : vector<16x16xf32> to vector<16xf32>
    %94 = vector.shape_cast %93 : vector<16xf32> to vector<16x1xf32>
    %95 = vector.broadcast %94 : vector<16x1xf32> to vector<16x16xf32>
    %96 = arith.divf %92, %95 : vector<16x16xf32>
    %cst_36 = arith.constant dense<0.000000e+00> : vector<16x16xf32>
    %97 = tpu.matmul %96, %73, %cst_36 {dimension_numbers = #tpu.dot_dimension_numbers<[1], [0], [0], [1], [0, 0, 1, 1], [], []>} : vector<16x16xf32>, vector<16x16xf32>, vector<16x16xf32> -> vector<16x16xf32>
    %98 = tpu.concatenate %47, %72, %97 in 1 : vector<16x16xf32>, vector<16x16xf32>, vector<16x16xf32> -> vector<16x48xf32>
    %99 = vector.extract_strided_slice %19 {offsets = [0, 0], sizes = [1, 48], strides = [1, 1]} : vector<2x48xf32> to vector<1x48xf32>
    %100 = vector.broadcast %99 : vector<1x48xf32> to vector<16x48xf32>
    %101 = arith.mulf %98, %100 : vector<16x48xf32>
    %102 = vector.extract_strided_slice %19 {offsets = [1, 0], sizes = [1, 48], strides = [1, 1]} : vector<2x48xf32> to vector<1x48xf32>
    %103 = vector.broadcast %102 : vector<1x48xf32> to vector<16x48xf32>
    %104 = arith.addf %101, %103 : vector<16x48xf32>
    %c80 = arith.constant 80 : index
    %c0_37 = arith.constant 0 : index
    %105 = vector.load %arg4[%c80, %c0_37] : memref<272x128xf32, #tpu.memory_space<vmem>>, vector<48x54xf32>
    %c128 = arith.constant 128 : index
    %c0_38 = arith.constant 0 : index
    %106 = vector.load %arg4[%c128, %c0_38] : memref<272x128xf32, #tpu.memory_space<vmem>>, vector<2x48xf32>
    %cst_39 = arith.constant dense<0.000000e+00> : vector<16x54xf32>
    %107 = tpu.matmul %104, %105, %cst_39 {dimension_numbers = #tpu.dot_dimension_numbers<[1], [0], [0], [1], [0, 0, 1, 1], [], []>} : vector<16x48xf32>, vector<48x54xf32>, vector<16x54xf32> -> vector<16x54xf32>
    %108 = vector.extract_strided_slice %107 {offsets = [0, 48], sizes = [16, 6], strides = [1, 1]} : vector<16x54xf32> to vector<16x6xf32>
    %109 = tpu.transpose %108, [1, 0] : vector<16x6xf32> -> vector<6x16xf32>
    %110 = vector.extract_strided_slice %107 {offsets = [0, 0], sizes = [16, 16], strides = [1, 1]} : vector<16x54xf32> to vector<16x16xf32>
    %111 = vector.extract_strided_slice %107 {offsets = [0, 48], sizes = [16, 1], strides = [1, 1]} : vector<16x54xf32> to vector<16x1xf32>
    %112 = vector.extract_strided_slice %109 {offsets = [3, 0], sizes = [1, 16], strides = [1, 1]} : vector<6x16xf32> to vector<1x16xf32>
    %113 = vector.broadcast %111 : vector<16x1xf32> to vector<16x16xf32>
    %114 = vector.broadcast %112 : vector<1x16xf32> to vector<16x16xf32>
    %115 = arith.addf %113, %114 : vector<16x16xf32>
    %cst_40 = arith.constant 0.000000e+00 : f32
    %116 = vector.broadcast %cst_40 : f32 to vector<16x16xf32>
    %117 = arith.cmpf ogt, %115, %116 : vector<16x16xf32>
    %cst_41 = arith.constant 2.000000e-01 : f32
    %118 = vector.broadcast %cst_41 : f32 to vector<16x16xf32>
    %119 = arith.mulf %118, %115 : vector<16x16xf32>
    %120 = arith.select %117, %115, %119 : vector<16x16xi1>, vector<16x16xf32>
    %cst_42 = arith.constant 0.000000e+00 : f32
    %121 = vector.broadcast %cst_42 : f32 to vector<16x16xf32>
    %122 = arith.cmpf ogt, %3, %121 : vector<16x16xf32>
    %cst_43 = arith.constant -1.000000e+30 : f32
    %123 = vector.broadcast %cst_43 : f32 to vector<16x16xf32>
    %124 = arith.select %122, %120, %123 : vector<16x16xi1>, vector<16x16xf32>
    %cst_44 = arith.constant dense<0xFF800000> : vector<16xf32>
    %125 = vector.multi_reduction <maximumf>, %124, %cst_44 [1] : vector<16x16xf32> to vector<16xf32>
    %126 = vector.shape_cast %125 : vector<16xf32> to vector<16x1xf32>
    %127 = vector.broadcast %126 : vector<16x1xf32> to vector<16x16xf32>
    %128 = arith.subf %124, %127 : vector<16x16xf32>
    %129 = math.exp %128 : vector<16x16xf32>
    %cst_45 = arith.constant dense<0.000000e+00> : vector<16xf32>
    %130 = vector.multi_reduction <add>, %129, %cst_45 [1] : vector<16x16xf32> to vector<16xf32>
    %131 = vector.shape_cast %130 : vector<16xf32> to vector<16x1xf32>
    %132 = vector.broadcast %131 : vector<16x1xf32> to vector<16x16xf32>
    %133 = arith.divf %129, %132 : vector<16x16xf32>
    %cst_46 = arith.constant dense<0.000000e+00> : vector<16x16xf32>
    %134 = tpu.matmul %133, %110, %cst_46 {dimension_numbers = #tpu.dot_dimension_numbers<[1], [0], [0], [1], [0, 0, 1, 1], [], []>} : vector<16x16xf32>, vector<16x16xf32>, vector<16x16xf32> -> vector<16x16xf32>
    %135 = vector.extract_strided_slice %107 {offsets = [0, 16], sizes = [16, 16], strides = [1, 1]} : vector<16x54xf32> to vector<16x16xf32>
    %136 = vector.extract_strided_slice %107 {offsets = [0, 49], sizes = [16, 1], strides = [1, 1]} : vector<16x54xf32> to vector<16x1xf32>
    %137 = vector.extract_strided_slice %109 {offsets = [4, 0], sizes = [1, 16], strides = [1, 1]} : vector<6x16xf32> to vector<1x16xf32>
    %138 = vector.broadcast %136 : vector<16x1xf32> to vector<16x16xf32>
    %139 = vector.broadcast %137 : vector<1x16xf32> to vector<16x16xf32>
    %140 = arith.addf %138, %139 : vector<16x16xf32>
    %cst_47 = arith.constant 0.000000e+00 : f32
    %141 = vector.broadcast %cst_47 : f32 to vector<16x16xf32>
    %142 = arith.cmpf ogt, %140, %141 : vector<16x16xf32>
    %cst_48 = arith.constant 2.000000e-01 : f32
    %143 = vector.broadcast %cst_48 : f32 to vector<16x16xf32>
    %144 = arith.mulf %143, %140 : vector<16x16xf32>
    %145 = arith.select %142, %140, %144 : vector<16x16xi1>, vector<16x16xf32>
    %cst_49 = arith.constant 0.000000e+00 : f32
    %146 = vector.broadcast %cst_49 : f32 to vector<16x16xf32>
    %147 = arith.cmpf ogt, %3, %146 : vector<16x16xf32>
    %cst_50 = arith.constant -1.000000e+30 : f32
    %148 = vector.broadcast %cst_50 : f32 to vector<16x16xf32>
    %149 = arith.select %147, %145, %148 : vector<16x16xi1>, vector<16x16xf32>
    %cst_51 = arith.constant dense<0xFF800000> : vector<16xf32>
    %150 = vector.multi_reduction <maximumf>, %149, %cst_51 [1] : vector<16x16xf32> to vector<16xf32>
    %151 = vector.shape_cast %150 : vector<16xf32> to vector<16x1xf32>
    %152 = vector.broadcast %151 : vector<16x1xf32> to vector<16x16xf32>
    %153 = arith.subf %149, %152 : vector<16x16xf32>
    %154 = math.exp %153 : vector<16x16xf32>
    %cst_52 = arith.constant dense<0.000000e+00> : vector<16xf32>
    %155 = vector.multi_reduction <add>, %154, %cst_52 [1] : vector<16x16xf32> to vector<16xf32>
    %156 = vector.shape_cast %155 : vector<16xf32> to vector<16x1xf32>
    %157 = vector.broadcast %156 : vector<16x1xf32> to vector<16x16xf32>
    %158 = arith.divf %154, %157 : vector<16x16xf32>
    %cst_53 = arith.constant dense<0.000000e+00> : vector<16x16xf32>
    %159 = tpu.matmul %158, %135, %cst_53 {dimension_numbers = #tpu.dot_dimension_numbers<[1], [0], [0], [1], [0, 0, 1, 1], [], []>} : vector<16x16xf32>, vector<16x16xf32>, vector<16x16xf32> -> vector<16x16xf32>
    %160 = vector.extract_strided_slice %107 {offsets = [0, 32], sizes = [16, 16], strides = [1, 1]} : vector<16x54xf32> to vector<16x16xf32>
    %161 = vector.extract_strided_slice %107 {offsets = [0, 50], sizes = [16, 1], strides = [1, 1]} : vector<16x54xf32> to vector<16x1xf32>
    %162 = vector.extract_strided_slice %109 {offsets = [5, 0], sizes = [1, 16], strides = [1, 1]} : vector<6x16xf32> to vector<1x16xf32>
    %163 = vector.broadcast %161 : vector<16x1xf32> to vector<16x16xf32>
    %164 = vector.broadcast %162 : vector<1x16xf32> to vector<16x16xf32>
    %165 = arith.addf %163, %164 : vector<16x16xf32>
    %cst_54 = arith.constant 0.000000e+00 : f32
    %166 = vector.broadcast %cst_54 : f32 to vector<16x16xf32>
    %167 = arith.cmpf ogt, %165, %166 : vector<16x16xf32>
    %cst_55 = arith.constant 2.000000e-01 : f32
    %168 = vector.broadcast %cst_55 : f32 to vector<16x16xf32>
    %169 = arith.mulf %168, %165 : vector<16x16xf32>
    %170 = arith.select %167, %165, %169 : vector<16x16xi1>, vector<16x16xf32>
    %cst_56 = arith.constant 0.000000e+00 : f32
    %171 = vector.broadcast %cst_56 : f32 to vector<16x16xf32>
    %172 = arith.cmpf ogt, %3, %171 : vector<16x16xf32>
    %cst_57 = arith.constant -1.000000e+30 : f32
    %173 = vector.broadcast %cst_57 : f32 to vector<16x16xf32>
    %174 = arith.select %172, %170, %173 : vector<16x16xi1>, vector<16x16xf32>
    %cst_58 = arith.constant dense<0xFF800000> : vector<16xf32>
    %175 = vector.multi_reduction <maximumf>, %174, %cst_58 [1] : vector<16x16xf32> to vector<16xf32>
    %176 = vector.shape_cast %175 : vector<16xf32> to vector<16x1xf32>
    %177 = vector.broadcast %176 : vector<16x1xf32> to vector<16x16xf32>
    %178 = arith.subf %174, %177 : vector<16x16xf32>
    %179 = math.exp %178 : vector<16x16xf32>
    %cst_59 = arith.constant dense<0.000000e+00> : vector<16xf32>
    %180 = vector.multi_reduction <add>, %179, %cst_59 [1] : vector<16x16xf32> to vector<16xf32>
    %181 = vector.shape_cast %180 : vector<16xf32> to vector<16x1xf32>
    %182 = vector.broadcast %181 : vector<16x1xf32> to vector<16x16xf32>
    %183 = arith.divf %179, %182 : vector<16x16xf32>
    %cst_60 = arith.constant dense<0.000000e+00> : vector<16x16xf32>
    %184 = tpu.matmul %183, %160, %cst_60 {dimension_numbers = #tpu.dot_dimension_numbers<[1], [0], [0], [1], [0, 0, 1, 1], [], []>} : vector<16x16xf32>, vector<16x16xf32>, vector<16x16xf32> -> vector<16x16xf32>
    %185 = tpu.concatenate %134, %159, %184 in 1 : vector<16x16xf32>, vector<16x16xf32>, vector<16x16xf32> -> vector<16x48xf32>
    %186 = vector.extract_strided_slice %106 {offsets = [0, 0], sizes = [1, 48], strides = [1, 1]} : vector<2x48xf32> to vector<1x48xf32>
    %187 = vector.broadcast %186 : vector<1x48xf32> to vector<16x48xf32>
    %188 = arith.mulf %185, %187 : vector<16x48xf32>
    %189 = vector.extract_strided_slice %106 {offsets = [1, 0], sizes = [1, 48], strides = [1, 1]} : vector<2x48xf32> to vector<1x48xf32>
    %190 = vector.broadcast %189 : vector<1x48xf32> to vector<16x48xf32>
    %191 = arith.addf %188, %190 : vector<16x48xf32>
    %c136 = arith.constant 136 : index
    %c0_61 = arith.constant 0 : index
    %192 = vector.load %arg4[%c136, %c0_61] : memref<272x128xf32, #tpu.memory_space<vmem>>, vector<48x54xf32>
    %c184 = arith.constant 184 : index
    %c0_62 = arith.constant 0 : index
    %193 = vector.load %arg4[%c184, %c0_62] : memref<272x128xf32, #tpu.memory_space<vmem>>, vector<2x48xf32>
    %cst_63 = arith.constant dense<0.000000e+00> : vector<16x54xf32>
    %194 = tpu.matmul %191, %192, %cst_63 {dimension_numbers = #tpu.dot_dimension_numbers<[1], [0], [0], [1], [0, 0, 1, 1], [], []>} : vector<16x48xf32>, vector<48x54xf32>, vector<16x54xf32> -> vector<16x54xf32>
    %195 = vector.extract_strided_slice %194 {offsets = [0, 48], sizes = [16, 6], strides = [1, 1]} : vector<16x54xf32> to vector<16x6xf32>
    %196 = tpu.transpose %195, [1, 0] : vector<16x6xf32> -> vector<6x16xf32>
    %197 = vector.extract_strided_slice %194 {offsets = [0, 0], sizes = [16, 16], strides = [1, 1]} : vector<16x54xf32> to vector<16x16xf32>
    %198 = vector.extract_strided_slice %194 {offsets = [0, 48], sizes = [16, 1], strides = [1, 1]} : vector<16x54xf32> to vector<16x1xf32>
    %199 = vector.extract_strided_slice %196 {offsets = [3, 0], sizes = [1, 16], strides = [1, 1]} : vector<6x16xf32> to vector<1x16xf32>
    %200 = vector.broadcast %198 : vector<16x1xf32> to vector<16x16xf32>
    %201 = vector.broadcast %199 : vector<1x16xf32> to vector<16x16xf32>
    %202 = arith.addf %200, %201 : vector<16x16xf32>
    %cst_64 = arith.constant 0.000000e+00 : f32
    %203 = vector.broadcast %cst_64 : f32 to vector<16x16xf32>
    %204 = arith.cmpf ogt, %202, %203 : vector<16x16xf32>
    %cst_65 = arith.constant 2.000000e-01 : f32
    %205 = vector.broadcast %cst_65 : f32 to vector<16x16xf32>
    %206 = arith.mulf %205, %202 : vector<16x16xf32>
    %207 = arith.select %204, %202, %206 : vector<16x16xi1>, vector<16x16xf32>
    %cst_66 = arith.constant 0.000000e+00 : f32
    %208 = vector.broadcast %cst_66 : f32 to vector<16x16xf32>
    %209 = arith.cmpf ogt, %3, %208 : vector<16x16xf32>
    %cst_67 = arith.constant -1.000000e+30 : f32
    %210 = vector.broadcast %cst_67 : f32 to vector<16x16xf32>
    %211 = arith.select %209, %207, %210 : vector<16x16xi1>, vector<16x16xf32>
    %cst_68 = arith.constant dense<0xFF800000> : vector<16xf32>
    %212 = vector.multi_reduction <maximumf>, %211, %cst_68 [1] : vector<16x16xf32> to vector<16xf32>
    %213 = vector.shape_cast %212 : vector<16xf32> to vector<16x1xf32>
    %214 = vector.broadcast %213 : vector<16x1xf32> to vector<16x16xf32>
    %215 = arith.subf %211, %214 : vector<16x16xf32>
    %216 = math.exp %215 : vector<16x16xf32>
    %cst_69 = arith.constant dense<0.000000e+00> : vector<16xf32>
    %217 = vector.multi_reduction <add>, %216, %cst_69 [1] : vector<16x16xf32> to vector<16xf32>
    %218 = vector.shape_cast %217 : vector<16xf32> to vector<16x1xf32>
    %219 = vector.broadcast %218 : vector<16x1xf32> to vector<16x16xf32>
    %220 = arith.divf %216, %219 : vector<16x16xf32>
    %cst_70 = arith.constant dense<0.000000e+00> : vector<16x16xf32>
    %221 = tpu.matmul %220, %197, %cst_70 {dimension_numbers = #tpu.dot_dimension_numbers<[1], [0], [0], [1], [0, 0, 1, 1], [], []>} : vector<16x16xf32>, vector<16x16xf32>, vector<16x16xf32> -> vector<16x16xf32>
    %222 = vector.extract_strided_slice %194 {offsets = [0, 16], sizes = [16, 16], strides = [1, 1]} : vector<16x54xf32> to vector<16x16xf32>
    %223 = vector.extract_strided_slice %194 {offsets = [0, 49], sizes = [16, 1], strides = [1, 1]} : vector<16x54xf32> to vector<16x1xf32>
    %224 = vector.extract_strided_slice %196 {offsets = [4, 0], sizes = [1, 16], strides = [1, 1]} : vector<6x16xf32> to vector<1x16xf32>
    %225 = vector.broadcast %223 : vector<16x1xf32> to vector<16x16xf32>
    %226 = vector.broadcast %224 : vector<1x16xf32> to vector<16x16xf32>
    %227 = arith.addf %225, %226 : vector<16x16xf32>
    %cst_71 = arith.constant 0.000000e+00 : f32
    %228 = vector.broadcast %cst_71 : f32 to vector<16x16xf32>
    %229 = arith.cmpf ogt, %227, %228 : vector<16x16xf32>
    %cst_72 = arith.constant 2.000000e-01 : f32
    %230 = vector.broadcast %cst_72 : f32 to vector<16x16xf32>
    %231 = arith.mulf %230, %227 : vector<16x16xf32>
    %232 = arith.select %229, %227, %231 : vector<16x16xi1>, vector<16x16xf32>
    %cst_73 = arith.constant 0.000000e+00 : f32
    %233 = vector.broadcast %cst_73 : f32 to vector<16x16xf32>
    %234 = arith.cmpf ogt, %3, %233 : vector<16x16xf32>
    %cst_74 = arith.constant -1.000000e+30 : f32
    %235 = vector.broadcast %cst_74 : f32 to vector<16x16xf32>
    %236 = arith.select %234, %232, %235 : vector<16x16xi1>, vector<16x16xf32>
    %cst_75 = arith.constant dense<0xFF800000> : vector<16xf32>
    %237 = vector.multi_reduction <maximumf>, %236, %cst_75 [1] : vector<16x16xf32> to vector<16xf32>
    %238 = vector.shape_cast %237 : vector<16xf32> to vector<16x1xf32>
    %239 = vector.broadcast %238 : vector<16x1xf32> to vector<16x16xf32>
    %240 = arith.subf %236, %239 : vector<16x16xf32>
    %241 = math.exp %240 : vector<16x16xf32>
    %cst_76 = arith.constant dense<0.000000e+00> : vector<16xf32>
    %242 = vector.multi_reduction <add>, %241, %cst_76 [1] : vector<16x16xf32> to vector<16xf32>
    %243 = vector.shape_cast %242 : vector<16xf32> to vector<16x1xf32>
    %244 = vector.broadcast %243 : vector<16x1xf32> to vector<16x16xf32>
    %245 = arith.divf %241, %244 : vector<16x16xf32>
    %cst_77 = arith.constant dense<0.000000e+00> : vector<16x16xf32>
    %246 = tpu.matmul %245, %222, %cst_77 {dimension_numbers = #tpu.dot_dimension_numbers<[1], [0], [0], [1], [0, 0, 1, 1], [], []>} : vector<16x16xf32>, vector<16x16xf32>, vector<16x16xf32> -> vector<16x16xf32>
    %247 = vector.extract_strided_slice %194 {offsets = [0, 32], sizes = [16, 16], strides = [1, 1]} : vector<16x54xf32> to vector<16x16xf32>
    %248 = vector.extract_strided_slice %194 {offsets = [0, 50], sizes = [16, 1], strides = [1, 1]} : vector<16x54xf32> to vector<16x1xf32>
    %249 = vector.extract_strided_slice %196 {offsets = [5, 0], sizes = [1, 16], strides = [1, 1]} : vector<6x16xf32> to vector<1x16xf32>
    %250 = vector.broadcast %248 : vector<16x1xf32> to vector<16x16xf32>
    %251 = vector.broadcast %249 : vector<1x16xf32> to vector<16x16xf32>
    %252 = arith.addf %250, %251 : vector<16x16xf32>
    %cst_78 = arith.constant 0.000000e+00 : f32
    %253 = vector.broadcast %cst_78 : f32 to vector<16x16xf32>
    %254 = arith.cmpf ogt, %252, %253 : vector<16x16xf32>
    %cst_79 = arith.constant 2.000000e-01 : f32
    %255 = vector.broadcast %cst_79 : f32 to vector<16x16xf32>
    %256 = arith.mulf %255, %252 : vector<16x16xf32>
    %257 = arith.select %254, %252, %256 : vector<16x16xi1>, vector<16x16xf32>
    %cst_80 = arith.constant 0.000000e+00 : f32
    %258 = vector.broadcast %cst_80 : f32 to vector<16x16xf32>
    %259 = arith.cmpf ogt, %3, %258 : vector<16x16xf32>
    %cst_81 = arith.constant -1.000000e+30 : f32
    %260 = vector.broadcast %cst_81 : f32 to vector<16x16xf32>
    %261 = arith.select %259, %257, %260 : vector<16x16xi1>, vector<16x16xf32>
    %cst_82 = arith.constant dense<0xFF800000> : vector<16xf32>
    %262 = vector.multi_reduction <maximumf>, %261, %cst_82 [1] : vector<16x16xf32> to vector<16xf32>
    %263 = vector.shape_cast %262 : vector<16xf32> to vector<16x1xf32>
    %264 = vector.broadcast %263 : vector<16x1xf32> to vector<16x16xf32>
    %265 = arith.subf %261, %264 : vector<16x16xf32>
    %266 = math.exp %265 : vector<16x16xf32>
    %cst_83 = arith.constant dense<0.000000e+00> : vector<16xf32>
    %267 = vector.multi_reduction <add>, %266, %cst_83 [1] : vector<16x16xf32> to vector<16xf32>
    %268 = vector.shape_cast %267 : vector<16xf32> to vector<16x1xf32>
    %269 = vector.broadcast %268 : vector<16x1xf32> to vector<16x16xf32>
    %270 = arith.divf %266, %269 : vector<16x16xf32>
    %cst_84 = arith.constant dense<0.000000e+00> : vector<16x16xf32>
    %271 = tpu.matmul %270, %247, %cst_84 {dimension_numbers = #tpu.dot_dimension_numbers<[1], [0], [0], [1], [0, 0, 1, 1], [], []>} : vector<16x16xf32>, vector<16x16xf32>, vector<16x16xf32> -> vector<16x16xf32>
    %272 = tpu.concatenate %221, %246, %271 in 1 : vector<16x16xf32>, vector<16x16xf32>, vector<16x16xf32> -> vector<16x48xf32>
    %273 = vector.extract_strided_slice %193 {offsets = [0, 0], sizes = [1, 48], strides = [1, 1]} : vector<2x48xf32> to vector<1x48xf32>
    %274 = vector.broadcast %273 : vector<1x48xf32> to vector<16x48xf32>
    %275 = arith.mulf %272, %274 : vector<16x48xf32>
    %276 = vector.extract_strided_slice %193 {offsets = [1, 0], sizes = [1, 48], strides = [1, 1]} : vector<2x48xf32> to vector<1x48xf32>
    %277 = vector.broadcast %276 : vector<1x48xf32> to vector<16x48xf32>
    %278 = arith.addf %275, %277 : vector<16x48xf32>
    %c0_85 = arith.constant 0 : index
    %c0_86 = arith.constant 0 : index
    %c0_87 = arith.constant 0 : index
    %279 = vector.load %arg3[%c0_85, %c0_86, %c0_87] : memref<1x2x16xf32, #tpu.memory_space<vmem>>, vector<1x2x16xf32>
    %280 = vector.shape_cast %279 : vector<1x2x16xf32> to vector<2x16xf32>
    %cst_88 = arith.constant dense<0.000000e+00> : vector<2x48xf32>
    %281 = tpu.matmul %280, %278, %cst_88 {dimension_numbers = #tpu.dot_dimension_numbers<[1], [0], [0], [1], [0, 0, 1, 1], [], []>} : vector<2x16xf32>, vector<16x48xf32>, vector<2x48xf32> -> vector<2x48xf32>
    %c192 = arith.constant 192 : index
    %c0_89 = arith.constant 0 : index
    %282 = vector.load %arg4[%c192, %c0_89] : memref<272x128xf32, #tpu.memory_space<vmem>>, vector<48x16xf32>
    %cst_90 = arith.constant dense<0.000000e+00> : vector<2x16xf32>
    %283 = tpu.matmul %281, %282, %cst_90 {dimension_numbers = #tpu.dot_dimension_numbers<[1], [0], [0], [1], [0, 0, 1, 1], [], []>} : vector<2x48xf32>, vector<48x16xf32>, vector<2x16xf32> -> vector<2x16xf32>
    %c240 = arith.constant 240 : index
    %c0_91 = arith.constant 0 : index
    %284 = vector.load %arg4[%c240, %c0_91] : memref<272x128xf32, #tpu.memory_space<vmem>>, vector<1x16xf32>
    %285 = vector.broadcast %284 : vector<1x16xf32> to vector<2x16xf32>
    %286 = arith.addf %283, %285 : vector<2x16xf32>
    %cst_92 = arith.constant 0.000000e+00 : f32
    %287 = vector.broadcast %cst_92 : f32 to vector<2x16xf32>
    %288 = arith.maximumf %286, %287 : vector<2x16xf32>
    %c248 = arith.constant 248 : index
    %c0_93 = arith.constant 0 : index
    %289 = vector.load %arg4[%c248, %c0_93] : memref<272x128xf32, #tpu.memory_space<vmem>>, vector<16x4xf32>
    %cst_94 = arith.constant dense<0.000000e+00> : vector<2x4xf32>
    %290 = tpu.matmul %288, %289, %cst_94 {dimension_numbers = #tpu.dot_dimension_numbers<[1], [0], [0], [1], [0, 0, 1, 1], [], []>} : vector<2x16xf32>, vector<16x4xf32>, vector<2x4xf32> -> vector<2x4xf32>
    %c264 = arith.constant 264 : index
    %c0_95 = arith.constant 0 : index
    %291 = vector.load %arg4[%c264, %c0_95] : memref<272x128xf32, #tpu.memory_space<vmem>>, vector<1x4xf32>
    %292 = vector.broadcast %291 : vector<1x4xf32> to vector<2x4xf32>
    %293 = arith.addf %290, %292 : vector<2x4xf32>
    %cst_96 = arith.constant dense<0xFF800000> : vector<2xf32>
    %294 = vector.multi_reduction <maximumf>, %293, %cst_96 [1] : vector<2x4xf32> to vector<2xf32>
    %295 = vector.shape_cast %294 : vector<2xf32> to vector<2x1xf32>
    %296 = vector.broadcast %295 : vector<2x1xf32> to vector<2x4xf32>
    %297 = arith.subf %293, %296 : vector<2x4xf32>
    %298 = math.exp %297 : vector<2x4xf32>
    %cst_97 = arith.constant dense<0.000000e+00> : vector<2xf32>
    %299 = vector.multi_reduction <add>, %298, %cst_97 [1] : vector<2x4xf32> to vector<2xf32>
    %300 = vector.shape_cast %299 : vector<2xf32> to vector<2x1xf32>
    %301 = math.log %300 : vector<2x1xf32>
    %302 = vector.broadcast %301 : vector<2x1xf32> to vector<2x4xf32>
    %303 = arith.subf %297, %302 : vector<2x4xf32>
    %c0_98 = arith.constant 0 : index
    %c0_99 = arith.constant 0 : index
    %c0_100 = arith.constant 0 : index
    %304 = vector.load %arg5[%c0_98, %c0_99, %c0_100] : memref<1x2x4xf32, #tpu.memory_space<vmem>>, vector<1x2x4xf32>
    %305 = vector.shape_cast %304 : vector<1x2x4xf32> to vector<2x4xf32>
    %306 = vector.shape_cast %303 : vector<2x4xf32> to vector<1x2x4xf32>
    tpu.vector_store %arg5[%c0_98, %c0_99, %c0_100], %306 {strides = array<i32>} : memref<1x2x4xf32, #tpu.memory_space<vmem>>, vector<1x2x4xf32>,
    return
  }
  func.func @transform_0(%arg0: i32) -> (i32, i32, i32) {
    %c0_i32 = arith.constant 0 : i32
    %c0_i32_0 = arith.constant 0 : i32
    %c0_i32_1 = arith.constant 0 : i32
    return %arg0, %c0_i32, %c0_i32_0 : i32, i32, i32
  }
  func.func @transform_1(%arg0: i32) -> (i32, i32, i32) {
    %c0_i32 = arith.constant 0 : i32
    %c0_i32_0 = arith.constant 0 : i32
    %c0_i32_1 = arith.constant 0 : i32
    return %arg0, %c0_i32, %c0_i32_0 : i32, i32, i32
  }
  func.func @transform_2(%arg0: i32) -> (i32, i32, i32) {
    %c0_i32 = arith.constant 0 : i32
    %c0_i32_0 = arith.constant 0 : i32
    %c0_i32_1 = arith.constant 0 : i32
    return %arg0, %c0_i32, %c0_i32_0 : i32, i32, i32
  }
  func.func @transform_3(%arg0: i32) -> (i32, i32) {
    %c0_i32 = arith.constant 0 : i32
    %c0_i32_0 = arith.constant 0 : i32
    %c0_i32_1 = arith.constant 0 : i32
    return %c0_i32, %c0_i32_0 : i32, i32
  }
  func.func @transform_4(%arg0: i32) -> (i32, i32, i32) {
    %c0_i32 = arith.constant 0 : i32
    %c0_i32_0 = arith.constant 0 : i32
    %c0_i32_1 = arith.constant 0 : i32
    return %arg0, %c0_i32, %c0_i32_0 : i32, i32, i32
  }
}

</mosaic_0001>

<llo_original>
// kernel: tpu_custom_call.1
$region0: #{tpu_custom_call.1}
  #allocation0 [shape = 'u32[]', space=smem, size = 0x4, offset = 0x4, fixed_abs, tag = 'smem constant byte address 0x4 - core index']
  #allocation1 [shape = 'u32[72,128]{1,0:T(1,128)}', space=vmem, size = 0x9000, scoped, tag = 'internal scratch']
  %s0 = inlined_call_operand.vmem [shape: f32[4,16,8], index: 0, kind: input, shape index: {}]
  %s1 = inlined_call_operand.vmem [shape: f32[4,16,16], index: 1, kind: input, shape index: {}]
  %s2 = inlined_call_operand.vmem [shape: f32[4,2,16], index: 2, kind: input, shape index: {}]
  %s3 = inlined_call_operand.hbm [shape: f32[272,128], index: 3, kind: input, shape index: {}]
  %s4 = inlined_call_operand.hbm [shape: f32[4,2,4], index: 4, kind: output, shape index: {}]
  %s5 = sld [smem:[#allocation0]]
  $region53: #{tpu_custom_call.1} parent=0
    _
  %s7 = ssub.s32 1, %s5
  %s8 = scalar_select 0, %s7, %s5
  $region1: #{tpu_custom_call.1} parent=0
    #allocation2 [shape = 'u8[139264]{0}', space=vmem, size = 0x22000, scoped, tag = 'input window, operand 3, single buffered']
    #allocation3 [shape = 's32[2]{0}', space=sflag, size = 0x8, scoped, tag = 'scoped memory for tpu_custom_call.1']
    #allocation4 [shape = 's32[2]{0}', space=sflag, size = 0x8, scoped, tag = 'scoped memory for tpu_custom_call.1']
    #allocation5 [shape = 'u8[2048]{0}', space=vmem, size = 0x800, scoped, tag = 'output window, operand 0']
    %9 = vsyncpa [#allocation3], 0
    %10 = vsyncpa [#allocation4], 0
    %s11 = scalar_lea.sflag [#allocation4], 1
    %12 = vsyncpa %s11, 0
    loop: start=0, step=1, limit=6
    $region2: #{tpu_custom_call.1} parent=1 // loop_pre_header
      _
    $region3: #{tpu_custom_call.1} parent=1 // loop_header
      %s14 = sphi 0, %s18
      %p15 = scmp.ge.s32.totalorder %s14, 6
      %s24 = sphi 0, %s26
      %s27 = sphi 0, %s24
      %s28 = sphi 0, %s27
      %s44 = sphi 0, %s28
      %s50 = sphi 0, %s52
      %s53 = sphi 0, %s50
      %s54 = sphi 0, %s53
      %s70 = sphi 0, %s54
      %s76 = sphi 0, %s78
      %s79 = sphi 0, %s76
      %s80 = sphi 0, %s79
      %s96 = sphi 0, %s80
      %s100 = sphi 0, %s100
      %s102 = sphi 0, %s100
      %s103 = sphi 0, %s102
      %s117 = sphi 0, %s103
      %s123 = sphi 0, %s125
      %s126 = sphi 0, %s123
      %s127 = sphi 0, %s126
      %s143 = sphi 0, %s127
    $region4: #{tpu_custom_call.1} parent=1 // loop_header_branch
      %17 = sbr.rel (%p15) target = $region8
    $region5: #{tpu_custom_call.1} parent=1 // loop_body
      %s19 = ssub.s32 %s14, 1
      %s20 = ssub.s32 %s14, 2
      %s21 = sadd.s32 %s14, 1
      %s22 = ssub.s32 %s14, %s21
      %p23 = scmp.eq.s32.totalorder %s22, 0
      %s25 = sadd.s32 %s24, 1
      %s26 = scalar_select %p23, %s24, %s25
      %p29 = pneg %p23
      %p30 = scmp.eq.s32.totalorder %s14, 3
      %p31 = por %p29, %p30
      %p32 = scmp.ne.s32.totalorder %s24, %s27
      %p33 = scmp.eq.s32.totalorder %s14, 0
      %p34 = por %p32, %p33
      %p35 = scmp.ne.s32.totalorder %s24, %s27
      %p36 = scmp.eq.s32.totalorder %s19, 3
      %p37 = por %p35, %p36
      %p38 = scmp.ne.s32.totalorder %s27, %s28
      %p39 = scmp.eq.s32.totalorder %s19, 0
      %p40 = por %p38, %p39
      %p41 = scmp.ne.s32.totalorder %s27, %s28
      %p42 = scmp.eq.s32.totalorder %s20, 3
      %p43 = por %p41, %p42
      %p45 = scmp.ne.s32.totalorder %s28, %s44
      %p46 = scmp.eq.s32.totalorder %s20, 0
      %p47 = por %p45, %p46
      %s48 = ssub.s32 %s14, %s21
      %p49 = scmp.eq.s32.totalorder %s48, 0
      %s51 = sadd.s32 %s50, 1
      %s52 = scalar_select %p49, %s50, %s51
      %p55 = pneg %p49
      %p56 = scmp.eq.s32.totalorder %s14, 3
      %p57 = por %p55, %p56
      %p58 = scmp.ne.s32.totalorder %s50, %s53
      %p59 = scmp.eq.s32.totalorder %s14, 0
      %p60 = por %p58, %p59
      %p61 = scmp.ne.s32.totalorder %s50, %s53
      %p62 = scmp.eq.s32.totalorder %s19, 3
      %p63 = por %p61, %p62
      %p64 = scmp.ne.s32.totalorder %s53, %s54
      %p65 = scmp.eq.s32.totalorder %s19, 0
      %p66 = por %p64, %p65
      %p67 = scmp.ne.s32.totalorder %s53, %s54
      %p68 = scmp.eq.s32.totalorder %s20, 3
      %p69 = por %p67, %p68
      %p71 = scmp.ne.s32.totalorder %s54, %s70
      %p72 = scmp.eq.s32.totalorder %s20, 0
      %p73 = por %p71, %p72
      %s74 = ssub.s32 %s14, %s21
      %p75 = scmp.eq.s32.totalorder %s74, 0
      %s77 = sadd.s32 %s76, 1
      %s78 = scalar_select %p75, %s76, %s77
      %p81 = pneg %p75
      %p82 = scmp.eq.s32.totalorder %s14, 3
      %p83 = por %p81, %p82
      %p84 = scmp.ne.s32.totalorder %s76, %s79
      %p85 = scmp.eq.s32.totalorder %s14, 0
      %p86 = por %p84, %p85
      %p87 = scmp.ne.s32.totalorder %s76, %s79
      %p88 = scmp.eq.s32.totalorder %s19, 3
      %p89 = por %p87, %p88
      %p90 = scmp.ne.s32.totalorder %s79, %s80
      %p91 = scmp.eq.s32.totalorder %s19, 0
      %p92 = por %p90, %p91
      %p93 = scmp.ne.s32.totalorder %s79, %s80
      %p94 = scmp.eq.s32.totalorder %s20, 3
      %p95 = por %p93, %p94
      %p97 = scmp.ne.s32.totalorder %s80, %s96
      %p98 = scmp.eq.s32.totalorder %s20, 0
      %p99 = por %p97, %p98
      %s101 = sadd.s32 %s100, 1
      %p104 = scmp.eq.s32.totalorder %s14, 3
      %p105 = scmp.ne.s32.totalorder %s100, %s102
      %p106 = scmp.eq.s32.totalorder %s14, 0
      %p107 = por %p105, %p106
      %p108 = scmp.ne.s32.totalorder %s100, %s102
      %p109 = scmp.eq.s32.totalorder %s19, 3
      %p110 = por %p108, %p109
      %p111 = scmp.ne.s32.totalorder %s102, %s103
      %p112 = scmp.eq.s32.totalorder %s19, 0
      %p113 = por %p111, %p112
      %p114 = scmp.ne.s32.totalorder %s102, %s103
      %p115 = scmp.eq.s32.totalorder %s20, 3
      %p116 = por %p114, %p115
      %p118 = scmp.ne.s32.totalorder %s103, %s117
      %p119 = scmp.eq.s32.totalorder %s20, 0
      %p120 = por %p118, %p119
      %s121 = ssub.s32 %s14, %s21
      %p122 = scmp.eq.s32.totalorder %s121, 0
      %s124 = sadd.s32 %s123, 1
      %s125 = scalar_select %p122, %s123, %s124
      %p128 = pneg %p122
      %p129 = scmp.eq.s32.totalorder %s14, 3
      %p130 = por %p128, %p129
      %p131 = scmp.ne.s32.totalorder %s123, %s126
      %p132 = scmp.eq.s32.totalorder %s14, 0
      %p133 = por %p131, %p132
      %p134 = scmp.ne.s32.totalorder %s123, %s126
      %p135 = scmp.eq.s32.totalorder %s19, 3
      %p136 = por %p134, %p135
      %p137 = scmp.ne.s32.totalorder %s126, %s127
      %p138 = scmp.eq.s32.totalorder %s19, 0
      %p139 = por %p137, %p138
      %p140 = scmp.ne.s32.totalorder %s126, %s127
      %p141 = scmp.eq.s32.totalorder %s20, 3
      %p142 = por %p140, %p141
      %p144 = scmp.ne.s32.totalorder %s127, %s143
      %p145 = scmp.eq.s32.totalorder %s20, 0
      %p146 = por %p144, %p145
      %p147 = scmp.le.s32.totalorder 1, %s14
      %p148 = scmp.lt.s32.totalorder %s14, 5
      %p149 = pnand %p147, %p148
      %p150 = pneg %p149
      // Predicated region
      $region9: #{tpu_custom_call.1} parent=5 // pred_check
        _
      $region10: #{tpu_custom_call.1} parent=5 // pred_check_branch
        %152 = sbr.rel (%p149) target = $region12
      $region11: #{tpu_custom_call.1} parent=5 // pred_region
        %s153 = ssub.s32 %s14, 1
        // Predicated region
        $region13: #{tpu_custom_call.1} parent=11 // pred_check
          %p154 = pneg %p113
        $region14: #{tpu_custom_call.1} parent=11 // pred_check_branch
          %156 = sbr.rel (%p154) target = $region16
        $region15: #{tpu_custom_call.1} parent=11 // pred_region
          %158 = vsyncadd [#allocation3], 0
          %s159 = sshll.u32 %s3, 4
          %s160 = int_to_ptr.hbm [resolvable:$true] %s159
          %s161 = sshll.u32 [#allocation2], 4
          %s162 = int_to_ptr.vmem [resolvable:$true] %s161
          %167 = dma.hbm_to_vmem [thread:$0]  %s160, 4352, %s162, [#allocation3], 128, 128, 8
        $region16: #{tpu_custom_call.1} parent=11 // pred_fallthru
          _
      $region12: #{tpu_custom_call.1} parent=5 // pred_fallthru
        _
      %p168 = scmp.lt.s32.totalorder %s14, 4
      // Predicated region
      $region17: #{tpu_custom_call.1} parent=5 // pred_check
        %p169 = pneg %p168
      $region18: #{tpu_custom_call.1} parent=5 // pred_check_branch
        %171 = sbr.rel (%p169) target = $region20
      $region19: #{tpu_custom_call.1} parent=5 // pred_region
        // Predicated region
        $region21: #{tpu_custom_call.1} parent=19 // pred_check
          %p172 = pneg %p34
        $region22: #{tpu_custom_call.1} parent=19 // pred_check_branch
          %174 = sbr.rel (%p172) target = $region24
        $region23: #{tpu_custom_call.1} parent=19 // pred_region
          %p175 = scmp.lt.s32.totalorder %s14, 3
          %s176 = scalar_select %p175, %s14, 3
          %s177 = smul.addr %s176, 2
          %s178 = smul.addr %s177, 8
          %s179 = scalar_lea.vmem %s0, %s178
        $region24: #{tpu_custom_call.1} parent=19 // pred_fallthru
          _
        // Predicated region
        $region25: #{tpu_custom_call.1} parent=19 // pred_check
          %p180 = pneg %p60
        $region26: #{tpu_custom_call.1} parent=19 // pred_check_branch
          %182 = sbr.rel (%p180) target = $region28
        $region27: #{tpu_custom_call.1} parent=19 // pred_region
          %p183 = scmp.lt.s32.totalorder %s14, 3
          %s184 = scalar_select %p183, %s14, 3
          %s185 = smul.addr %s184, 2
          %s186 = smul.addr %s185, 8
          %s187 = scalar_lea.vmem %s1, %s186
        $region28: #{tpu_custom_call.1} parent=19 // pred_fallthru
          _
        // Predicated region
        $region29: #{tpu_custom_call.1} parent=19 // pred_check
          %p188 = pneg %p86
        $region30: #{tpu_custom_call.1} parent=19 // pred_check_branch
          %190 = sbr.rel (%p188) target = $region32
        $region31: #{tpu_custom_call.1} parent=19 // pred_region
          %p191 = scmp.lt.s32.totalorder %s14, 3
          %s192 = scalar_select %p191, %s14, 3
          %s193 = smul.addr %s192, 2
          %s194 = scalar_lea.vmem %s2, %s193
        $region32: #{tpu_custom_call.1} parent=19 // pred_fallthru
          _
      $region20: #{tpu_custom_call.1} parent=5 // pred_fallthru
        _
      %p195 = scmp.le.s32.totalorder 1, %s14
      %p196 = scmp.lt.s32.totalorder %s14, 5
      %p197 = pnand %p195, %p196
      %p198 = pneg %p197
      // Predicated region
      $region33: #{tpu_custom_call.1} parent=5 // pred_check
        _
      $region34: #{tpu_custom_call.1} parent=5 // pred_check_branch
        %200 = sbr.rel (%p197) target = $region36
      $region35: #{tpu_custom_call.1} parent=5 // pred_region
        %s201 = ssub.s32 %s14, 1
        // Predicated region
        $region37: #{tpu_custom_call.1} parent=35 // pred_check
          %p202 = pneg %p113
        $region38: #{tpu_custom_call.1} parent=35 // pred_check_branch
          %204 = sbr.rel (%p202) target = $region40
        $region39: #{tpu_custom_call.1} parent=35 // pred_region
          %206 = dma.done [#allocation3], 4352
        $region40: #{tpu_custom_call.1} parent=35 // pred_fallthru
          _
        %p207 = scmp.lt.s32.totalorder %s19, 3
        %s208 = scalar_select %p207, %s19, 3
        %s209 = smul.addr %s208, 2
        %s210 = smul.addr %s209, 8
        %s211 = scalar_lea.vmem %s0, %s210
        %p212 = pneg %p40
        %p213 = pneg %p37
        %p214 = scmp.lt.s32.totalorder %s19, 3
        %s215 = scalar_select %p214, %s19, 3
        %s216 = smul.addr %s215, 2
        %s217 = smul.addr %s216, 8
        %s218 = scalar_lea.vmem %s1, %s217
        %p219 = pneg %p66
        %p220 = pneg %p63
        %p221 = scmp.lt.s32.totalorder %s19, 3
        %s222 = scalar_select %p221, %s19, 3
        %s223 = smul.addr %s222, 2
        %s224 = scalar_lea.vmem %s2, %s223
        %p225 = pneg %p92
        %p226 = pneg %p89
        %p227 = pneg %p113
        %p228 = pneg %p110
        %p229 = pneg %p139
        %p230 = pneg %p136
        %s231 = sand.u32 %s126, 1
        %s232 = scalar_lea.sflag [#allocation4], %s231
        %s233 = sand.u32 %s126, 1
        %s234 = smul.addr %s233, 2
        %s235 = scalar_lea.vmem [#allocation5], %s234
        %p236 = scmp.lt.s32.totalorder %s19, 3
        %s237 = scalar_select %p236, %s19, 3
        %s238 = smul.addr %s237, 2
        %s239 = smul.addr %s238, 8
        %s240 = scalar_lea.vmem %s0, %s239
        %p241 = scmp.lt.s32.totalorder %s19, 3
        %s242 = scalar_select %p241, %s19, 3
        %s243 = smul.addr %s242, 2
        %s244 = smul.addr %s243, 8
        %s245 = scalar_lea.vmem %s1, %s244
        %p246 = scmp.lt.s32.totalorder %s19, 3
        %s247 = scalar_select %p246, %s19, 3
        %s248 = smul.addr %s247, 2
        %s249 = scalar_lea.vmem %s2, %s248
        %v250 = vld [vmem:[%s240] sm:$0xff]
        %v251 = vld [vmem:[%s240 + $0x8] sm:$0xff]
        %v252 = vld [vmem:[%s245] sm:$0xff]
        %v253 = vld [vmem:[%s245 + $0x8] sm:$0xff]
        %v254 = vld [vmem:[#allocation2] sm:$0xff]
        %v255 = vld [vmem:[#allocation2 + $0x8] sm:$0x1]
        %v256 = vperm.slane %v255, 0
        %vm257 = vcmask 64512
        %v259 = vsel %vm257, %v250, 0
        %v262 = vsel %vm257, %v251, 0
        %264 = vmatpush.msra.mxu0 0.0
        %265 = vmatpush.msra.mxu0 0.0
        %266 = vmatpush.msra.mxu0 0.0
        %267 = vmatpush.msra.mxu0 0.0
        %268 = vmatpush.msra.mxu0 0.0
        %269 = vmatpush.msra.mxu0 0.0
        %270 = vmatpush.msra.mxu0 0.0
        %271 = vmatpush.msra.mxu0 0.0
        %272 = vmatpush.msra.mxu0 0.0
        %273 = vmatpush.msra.mxu0 0.0
        %274 = vmatpush.msra.mxu0 0.0
        %275 = vmatpush.msra.mxu0 0.0
        %276 = vmatpush.msra.mxu0 0.0
        %277 = vmatpush.msra.mxu0 0.0
        %278 = vmatpush.msra.mxu0 0.0
        %279 = vmatpush.msra.mxu0 %v254
        %280 = vmatmul.f32.gmra.mxu0 %v259
        %v281 = vpop.f32.mrf.mxu0
        %v282 = vadd.f32 %v256, %v281
        %283 = vmatmul.f32.gmra.mxu0 %v262
        %v284 = vpop.f32.mrf.mxu0
        %v285 = vadd.f32 %v256, %v284
        %286 = vdwg.mxu0
        %v287 = vmax.f32 %v282, 0.0
        %v288 = vmax.f32 %v285, 0.0
        %v289 = vld [vmem:[#allocation2 + $0x10] sm:$0xff]
        %v290 = vld [vmem:[#allocation2 + $0x18] sm:$0xff]
        %v291 = vld [vmem:[#allocation2 + $0x20] sm:$0xff]
        %v292 = vld [vmem:[#allocation2 + $0x28] sm:$0xff]
        %v293 = vld [vmem:[#allocation2 + $0x30] sm:$0x1]
        %v294 = vperm.slane %v293, 0
        %vm295 = vcmask 261120
        %v297 = vsel %vm295, %v287, 0
        %v300 = vsel %vm295, %v288, 0
        %302 = vmatpush.msra.mxu0 0.0
        %303 = vmatpush.msra.mxu0 0.0
        %304 = vmatpush.msra.mxu0 0.0
        %305 = vmatpush.msra.mxu0 0.0
        %306 = vmatpush.msra.mxu0 0.0
        %307 = vmatpush.msra.mxu0 0.0
        %308 = vmatpush.msra.mxu0 0.0
        %309 = vmatpush.msra.mxu0 0.0
        %310 = vmatpush.msra.mxu0 0.0
        %311 = vmatpush.msra.mxu0 0.0
        %312 = vmatpush.msra.mxu0 0.0
        %313 = vmatpush.msra.mxu0 0.0
        %314 = vmatpush.msra.mxu0 %v292
        %315 = vmatpush.msra.mxu0 %v291
        %316 = vmatpush.msra.mxu0 %v290
        %317 = vmatpush.msra.mxu0 %v289
        %318 = vmatmul.f32.gmra.mxu0 %v297
        %v319 = vpop.f32.mrf.mxu0
        %v320 = vadd.f32 %v294, %v319
        %321 = vmatmul.f32.gmra.mxu0 %v300
        %v322 = vpop.f32.mrf.mxu0
        %v323 = vadd.f32 %v294, %v322
        %324 = vdwg.mxu0
        %v325 = vmax.f32 %v320, 0.0
        %v326 = vmax.f32 %v323, 0.0
        %v327 = vld [vmem:[#allocation2 + $0x38] sm:$0xff]
        %v328 = vld [vmem:[#allocation2 + $0x40] sm:$0xff]
        %v329 = vld [vmem:[#allocation2 + $0x48] sm:$0x3]
        %vm330 = vcmask 130048
        %v332 = vsel %vm330, %v325, 0
        %v335 = vsel %vm330, %v326, 0
        %337 = vmatpush.msra.mxu0 0.0
        %338 = vmatpush.msra.mxu0 0.0
        %339 = vmatpush.msra.mxu0 0.0
        %340 = vmatpush.msra.mxu0 0.0
        %341 = vmatpush.msra.mxu0 0.0
        %342 = vmatpush.msra.mxu0 0.0
        %343 = vmatpush.msra.mxu0 0.0
        %344 = vmatpush.msra.mxu0 0.0
        %345 = vmatpush.msra.mxu0 0.0
        %346 = vmatpush.msra.mxu0 0.0
        %347 = vmatpush.msra.mxu0 0.0
        %348 = vmatpush.msra.mxu0 0.0
        %349 = vmatpush.msra.mxu0 0.0
        %350 = vmatpush.msra.mxu0 0.0
        %351 = vmatpush.msra.mxu0 %v328
        %352 = vmatpush.msra.mxu0 %v327
        %353 = vmatmul.f32.gmra.mxu0 %v332
        %v354 = vpop.f32.mrf.mxu0
        %v355 = vadd.f32 0.0, %v354
        %356 = vmatmul.f32.gmra.mxu0 %v335
        %v357 = vpop.f32.mrf.mxu0
        %v358 = vadd.f32 0.0, %v357
        %359 = vdwg.mxu0
        %362 = vrot.lane.b32.xlu0 %v355, 80
        %v363 = vpop.permute.xlu0 %362
        %364 = vrot.lane.b32.xlu0 %v358, 80
        %v365 = vpop.permute.xlu0 %364
        %368 = vxpose.xlu0.b32.start [1/16] %v363, 128
        %369 = vxpose.xlu0.b32.cont [2/16] %v365, 128
        %370 = vxpose.xlu0.b32.cont [3/16] 0.0, 128
        %371 = vxpose.xlu0.b32.cont [4/16] 0.0, 128
        %372 = vxpose.xlu0.b32.cont [5/16] 0.0, 128
        %373 = vxpose.xlu0.b32.cont [6/16] 0.0, 128
        %374 = vxpose.xlu0.b32.cont [7/16] 0.0, 128
        %375 = vxpose.xlu0.b32.cont [8/16] 0.0, 128
        %376 = vxpose.xlu0.b32.cont [9/16] 0.0, 128
        %377 = vxpose.xlu0.b32.cont [10/16] 0.0, 128
        %378 = vxpose.xlu0.b32.cont [11/16] 0.0, 128
        %379 = vxpose.xlu0.b32.cont [12/16] 0.0, 128
        %380 = vxpose.xlu0.b32.cont [13/16] 0.0, 128
        %381 = vxpose.xlu0.b32.cont [14/16] 0.0, 128
        %382 = vxpose.xlu0.b32.cont [15/16] 0.0, 128
        %383 = vxpose.xlu0.b32.end [16/16] 0.0, 128
        %v384 = vpop.trf.xlu0
        %v385 = vpop.trf.xlu0
        %v386 = vpop.trf.xlu0
        %v387 = vpop.trf.xlu0
        %v388 = vpop.trf.xlu0
        %v389 = vpop.trf.xlu0
        %v390 = vpop.trf.xlu0
        %v391 = vpop.trf.xlu0
        %v392 = vpop.trf.xlu0
        %v393 = vpop.trf.xlu0
        %v394 = vpop.trf.xlu0
        %v395 = vpop.trf.xlu0
        %v396 = vpop.trf.xlu0
        %v397 = vpop.trf.xlu0
        %v398 = vpop.trf.xlu0
        %v399 = vpop.trf.xlu0
        %400 = vset.pattern.permute.xlu0 48
        %401 = vperm.xlu0 %400, %v355
        %v402 = vpop.permute.xlu0 %401
        %404 = vset.pattern.permute.xlu0 48
        %405 = vperm.xlu0 %404, %v358
        %v406 = vpop.permute.xlu0 %405
        %v408 = vperm.slane %v384, 3
        %v409 = vadd.f32 %v402, %v408
        %v410 = vadd.f32 %v406, %v408
        %vm411 = vcmp.gt.f32.partialorder %v409, 0.0
        %vm412 = vcmp.gt.f32.partialorder %v410, 0.0
        %v413 = vmul.f32 %v409, 0.2
        %v414 = vmul.f32 %v410, 0.2
        %v415 = vsel %vm411, %v409, %v413
        %v416 = vsel %vm412, %v410, %v414
        %vm417 = vcmp.gt.f32.partialorder %v252, 0.0
        %vm418 = vcmp.gt.f32.partialorder %v253, 0.0
        %v419 = vsel %vm417, %v415, -1e+30
        %v420 = vsel %vm418, %v416, -1e+30
        %v421 = vsel %vm330, %v419, -inf
        %422 = vmax.xlane.f32.xlu0 %v421
        %v423 = vpop.xlane.xlu0 %422
        %v424 = vsel %vm330, %v420, -inf
        %425 = vmax.xlane.f32.xlu0 %v424
        %v426 = vpop.xlane.xlu0 %425
        %v427 = vsub.f32 %v419, %v423
        %v428 = vsub.f32 %v420, %v426
        %v429 = vmul.f32 %v427, 1.442695
        %v430 = vpow.pop %v429
        %v431 = vmul.f32 %v428, 1.442695
        %v432 = vpow.pop %v431
        %v433 = vsel %vm330, %v430, 0.0
        %434 = vadd.xlane.f32.xlu0 %v433
        %v435 = vpop.xlane.xlu0 %434
        %v436 = vsel %vm330, %v432, 0.0
        %437 = vadd.xlane.f32.xlu0 %v436
        %v438 = vpop.xlane.xlu0 %437
        %v439 = vrcp.pop %v435
        %v440 = vmul.f32 %v435, %v439
        %v441 = vsub.f32 1.0, %v440
        %v442 = vmul.f32 %v439, %v441
        %v443 = vadd.f32 %v439, %v442
        %vm444 = vweird.f32 %v435
        %vm445 = vweird.f32 %v439
        %vm446 = vmor %vm444, %vm445
        %v447 = vsel %vm446, %v439, %v443
        %v448 = vand.u32 2147483647, %v435
        %vm449 = vcmp.eq.f32.partialorder %v448, 8.507059e+37
        %v450 = vand.u32 %v435, 2147483648
        %v451 = vor.u32 1.1754944e-38, %v450
        %v452 = vsel %vm449, %v451, %v447
        %v453 = vmul.f32 %v430, %v452
        %v454 = vrcp.pop %v438
        %v455 = vmul.f32 %v438, %v454
        %v456 = vsub.f32 1.0, %v455
        %v457 = vmul.f32 %v454, %v456
        %v458 = vadd.f32 %v454, %v457
        %vm459 = vweird.f32 %v438
        %vm460 = vweird.f32 %v454
        %vm461 = vmor %vm459, %vm460
        %v462 = vsel %vm461, %v454, %v458
        %v463 = vand.u32 2147483647, %v438
        %vm464 = vcmp.eq.f32.partialorder %v463, 8.507059e+37
        %v465 = vand.u32 %v438, 2147483648
        %v466 = vor.u32 1.1754944e-38, %v465
        %v467 = vsel %vm464, %v466, %v462
        %v468 = vmul.f32 %v432, %v467
        %v470 = vsel %vm330, %v453, 0
        %v473 = vsel %vm330, %v468, 0
        %475 = vmatpush.msra.mxu0 0.0
        %476 = vmatpush.msra.mxu0 0.0
        %477 = vmatpush.msra.mxu0 0.0
        %478 = vmatpush.msra.mxu0 0.0
        %479 = vmatpush.msra.mxu0 0.0
        %480 = vmatpush.msra.mxu0 0.0
        %481 = vmatpush.msra.mxu0 0.0
        %482 = vmatpush.msra.mxu0 0.0
        %483 = vmatpush.msra.mxu0 0.0
        %484 = vmatpush.msra.mxu0 0.0
        %485 = vmatpush.msra.mxu0 0.0
        %486 = vmatpush.msra.mxu0 0.0
        %487 = vmatpush.msra.mxu0 0.0
        %488 = vmatpush.msra.mxu0 0.0
        %489 = vmatpush.msra.mxu0 %v358
        %490 = vmatpush.msra.mxu0 %v355
        %491 = vmatmul.f32.gmra.mxu0 %v470
        %v492 = vpop.f32.mrf.mxu0
        %v493 = vadd.f32 0.0, %v492
        %494 = vmatmul.f32.gmra.mxu0 %v473
        %v495 = vpop.f32.mrf.mxu0
        %v496 = vadd.f32 0.0, %v495
        %497 = vdwg.mxu0
        %498 = vset.pattern.permute.xlu0 49
        %499 = vperm.xlu0 %498, %v355
        %v500 = vpop.permute.xlu0 %499
        %502 = vset.pattern.permute.xlu0 49
        %503 = vperm.xlu0 %502, %v358
        %v504 = vpop.permute.xlu0 %503
        %v506 = vperm.slane %v384, 4
        %v507 = vadd.f32 %v500, %v506
        %v508 = vadd.f32 %v504, %v506
        %vm509 = vcmp.gt.f32.partialorder %v507, 0.0
        %vm510 = vcmp.gt.f32.partialorder %v508, 0.0
        %v511 = vmul.f32 %v507, 0.2
        %v512 = vmul.f32 %v508, 0.2
        %v513 = vsel %vm509, %v507, %v511
        %v514 = vsel %vm510, %v508, %v512
        %v515 = vsel %vm417, %v513, -1e+30
        %v516 = vsel %vm418, %v514, -1e+30
        %v517 = vsel %vm330, %v515, -inf
        %518 = vmax.xlane.f32.xlu0 %v517
        %v519 = vpop.xlane.xlu0 %518
        %v520 = vsel %vm330, %v516, -inf
        %521 = vmax.xlane.f32.xlu0 %v520
        %v522 = vpop.xlane.xlu0 %521
        %v523 = vsub.f32 %v515, %v519
        %v524 = vsub.f32 %v516, %v522
        %v525 = vmul.f32 %v523, 1.442695
        %v526 = vpow.pop %v525
        %v527 = vmul.f32 %v524, 1.442695
        %v528 = vpow.pop %v527
        %v529 = vsel %vm330, %v526, 0.0
        %530 = vadd.xlane.f32.xlu0 %v529
        %v531 = vpop.xlane.xlu0 %530
        %v532 = vsel %vm330, %v528, 0.0
        %533 = vadd.xlane.f32.xlu0 %v532
        %v534 = vpop.xlane.xlu0 %533
        %v535 = vrcp.pop %v531
        %v536 = vmul.f32 %v531, %v535
        %v537 = vsub.f32 1.0, %v536
        %v538 = vmul.f32 %v535, %v537
        %v539 = vadd.f32 %v535, %v538
        %vm540 = vweird.f32 %v531
        %vm541 = vweird.f32 %v535
        %vm542 = vmor %vm540, %vm541
        %v543 = vsel %vm542, %v535, %v539
        %v544 = vand.u32 2147483647, %v531
        %vm545 = vcmp.eq.f32.partialorder %v544, 8.507059e+37
        %v546 = vand.u32 %v531, 2147483648
        %v547 = vor.u32 1.1754944e-38, %v546
        %v548 = vsel %vm545, %v547, %v543
        %v549 = vmul.f32 %v526, %v548
        %v550 = vrcp.pop %v534
        %v551 = vmul.f32 %v534, %v550
        %v552 = vsub.f32 1.0, %v551
        %v553 = vmul.f32 %v550, %v552
        %v554 = vadd.f32 %v550, %v553
        %vm555 = vweird.f32 %v534
        %vm556 = vweird.f32 %v550
        %vm557 = vmor %vm555, %vm556
        %v558 = vsel %vm557, %v550, %v554
        %v559 = vand.u32 2147483647, %v534
        %vm560 = vcmp.eq.f32.partialorder %v559, 8.507059e+37
        %v561 = vand.u32 %v534, 2147483648
        %v562 = vor.u32 1.1754944e-38, %v561
        %v563 = vsel %vm560, %v562, %v558
        %v564 = vmul.f32 %v528, %v563
        %565 = vrot.lane.b32.xlu0 %v355, 112
        %v566 = vpop.permute.xlu0 %565
        %567 = vrot.lane.b32.xlu0 %v358, 112
        %v568 = vpop.permute.xlu0 %567
        %v572 = vsel %vm330, %v549, 0
        %v575 = vsel %vm330, %v564, 0
        %577 = vmatpush.msra.mxu0 0.0
        %578 = vmatpush.msra.mxu0 0.0
        %579 = vmatpush.msra.mxu0 0.0
        %580 = vmatpush.msra.mxu0 0.0
        %581 = vmatpush.msra.mxu0 0.0
        %582 = vmatpush.msra.mxu0 0.0
        %583 = vmatpush.msra.mxu0 0.0
        %584 = vmatpush.msra.mxu0 0.0
        %585 = vmatpush.msra.mxu0 0.0
        %586 = vmatpush.msra.mxu0 0.0
        %587 = vmatpush.msra.mxu0 0.0
        %588 = vmatpush.msra.mxu0 0.0
        %589 = vmatpush.msra.mxu0 0.0
        %590 = vmatpush.msra.mxu0 0.0
        %591 = vmatpush.msra.mxu0 %v568
        %592 = vmatpush.msra.mxu0 %v566
        %593 = vmatmul.f32.gmra.mxu0 %v572
        %v594 = vpop.f32.mrf.mxu0
        %v595 = vadd.f32 0.0, %v594
        %596 = vmatmul.f32.gmra.mxu0 %v575
        %v597 = vpop.f32.mrf.mxu0
        %v598 = vadd.f32 0.0, %v597
        %599 = vdwg.mxu0
        %600 = vset.pattern.permute.xlu0 50
        %601 = vperm.xlu0 %600, %v355
        %v602 = vpop.permute.xlu0 %601
        %604 = vset.pattern.permute.xlu0 50
        %605 = vperm.xlu0 %604, %v358
        %v606 = vpop.permute.xlu0 %605
        %v608 = vperm.slane %v384, 5
        %v609 = vadd.f32 %v602, %v608
        %v610 = vadd.f32 %v606, %v608
        %vm611 = vcmp.gt.f32.partialorder %v609, 0.0
        %vm612 = vcmp.gt.f32.partialorder %v610, 0.0
        %v613 = vmul.f32 %v609, 0.2
        %v614 = vmul.f32 %v610, 0.2
        %v615 = vsel %vm611, %v609, %v613
        %v616 = vsel %vm612, %v610, %v614
        %v617 = vsel %vm417, %v615, -1e+30
        %v618 = vsel %vm418, %v616, -1e+30
        %v619 = vsel %vm330, %v617, -inf
        %620 = vmax.xlane.f32.xlu0 %v619
        %v621 = vpop.xlane.xlu0 %620
        %v622 = vsel %vm330, %v618, -inf
        %623 = vmax.xlane.f32.xlu0 %v622
        %v624 = vpop.xlane.xlu0 %623
        %v625 = vsub.f32 %v617, %v621
        %v626 = vsub.f32 %v618, %v624
        %v627 = vmul.f32 %v625, 1.442695
        %v628 = vpow.pop %v627
        %v629 = vmul.f32 %v626, 1.442695
        %v630 = vpow.pop %v629
        %v631 = vsel %vm330, %v628, 0.0
        %632 = vadd.xlane.f32.xlu0 %v631
        %v633 = vpop.xlane.xlu0 %632
        %v634 = vsel %vm330, %v630, 0.0
        %635 = vadd.xlane.f32.xlu0 %v634
        %v636 = vpop.xlane.xlu0 %635
        %v637 = vrcp.pop %v633
        %v638 = vmul.f32 %v633, %v637
        %v639 = vsub.f32 1.0, %v638
        %v640 = vmul.f32 %v637, %v639
        %v641 = vadd.f32 %v637, %v640
        %vm642 = vweird.f32 %v633
        %vm643 = vweird.f32 %v637
        %vm644 = vmor %vm642, %vm643
        %v645 = vsel %vm644, %v637, %v641
        %v646 = vand.u32 2147483647, %v633
        %vm647 = vcmp.eq.f32.partialorder %v646, 8.507059e+37
        %v648 = vand.u32 %v633, 2147483648
        %v649 = vor.u32 1.1754944e-38, %v648
        %v650 = vsel %vm647, %v649, %v645
        %v651 = vmul.f32 %v628, %v650
        %v652 = vrcp.pop %v636
        %v653 = vmul.f32 %v636, %v652
        %v654 = vsub.f32 1.0, %v653
        %v655 = vmul.f32 %v652, %v654
        %v656 = vadd.f32 %v652, %v655
        %vm657 = vweird.f32 %v636
        %vm658 = vweird.f32 %v652
        %vm659 = vmor %vm657, %vm658
        %v660 = vsel %vm659, %v652, %v656
        %v661 = vand.u32 2147483647, %v636
        %vm662 = vcmp.eq.f32.partialorder %v661, 8.507059e+37
        %v663 = vand.u32 %v636, 2147483648
        %v664 = vor.u32 1.1754944e-38, %v663
        %v665 = vsel %vm662, %v664, %v660
        %v666 = vmul.f32 %v630, %v665
        %667 = vrot.lane.b32.xlu0 %v355, 96
        %v668 = vpop.permute.xlu0 %667
        %669 = vrot.lane.b32.xlu0 %v358, 96
        %v670 = vpop.permute.xlu0 %669
        %v674 = vsel %vm330, %v651, 0
        %v677 = vsel %vm330, %v666, 0
        %679 = vmatpush.msra.mxu0 0.0
        %680 = vmatpush.msra.mxu0 0.0
        %681 = vmatpush.msra.mxu0 0.0
        %682 = vmatpush.msra.mxu0 0.0
        %683 = vmatpush.msra.mxu0 0.0
        %684 = vmatpush.msra.mxu0 0.0
        %685 = vmatpush.msra.mxu0 0.0
        %686 = vmatpush.msra.mxu0 0.0
        %687 = vmatpush.msra.mxu0 0.0
        %688 = vmatpush.msra.mxu0 0.0
        %689 = vmatpush.msra.mxu0 0.0
        %690 = vmatpush.msra.mxu0 0.0
        %691 = vmatpush.msra.mxu0 0.0
        %692 = vmatpush.msra.mxu0 0.0
        %693 = vmatpush.msra.mxu0 %v670
        %694 = vmatpush.msra.mxu0 %v668
        %695 = vmatmul.f32.gmra.mxu0 %v674
        %v696 = vpop.f32.mrf.mxu0
        %v697 = vadd.f32 0.0, %v696
        %698 = vmatmul.f32.gmra.mxu0 %v677
        %v699 = vpop.f32.mrf.mxu0
        %v700 = vadd.f32 0.0, %v699
        %701 = vdwg.mxu0
        %704 = vrot.lane.b32.xlu0 %v595, 16
        %v705 = vpop.permute.xlu0 %704
        %706 = vrot.lane.b32.xlu0 %v598, 16
        %v707 = vpop.permute.xlu0 %706
        %712 = vrot.lane.b32.xlu0 %v697, 32
        %v713 = vpop.permute.xlu0 %712
        %714 = vrot.lane.b32.xlu0 %v700, 32
        %v715 = vpop.permute.xlu0 %714
        %v718 = vsel %vm330, %v493, %v705
        %v719 = vsel %vm330, %v496, %v707
        %v720 = vsel %vm295, %v718, %v713
        %v721 = vsel %vm295, %v719, %v715
        %v722 = vperm.slane %v329, 0
        %v723 = vmul.f32 %v720, %v722
        %v724 = vmul.f32 %v721, %v722
        %v725 = vperm.slane %v329, 1
        %v726 = vadd.f32 %v723, %v725
        %v727 = vadd.f32 %v724, %v725
        %v728 = vld [vmem:[#allocation2 + $0x50] sm:$0xff]
        %v729 = vld [vmem:[#allocation2 + $0x58] sm:$0xff]
        %v730 = vld [vmem:[#allocation2 + $0x60] sm:$0xff]
        %v731 = vld [vmem:[#allocation2 + $0x68] sm:$0xff]
        %v732 = vld [vmem:[#allocation2 + $0x70] sm:$0xff]
        %v733 = vld [vmem:[#allocation2 + $0x78] sm:$0xff]
        %v734 = vld [vmem:[#allocation2 + $0x80] sm:$0x3]
        %vm735 = vcmask 392192
        %v737 = vsel %vm735, %v726, 0
        %v740 = vsel %vm735, %v727, 0
        %742 = vmatpush.msra.mxu0 0.0
        %743 = vmatpush.msra.mxu0 0.0
        %744 = vmatpush.msra.mxu0 0.0
        %745 = vmatpush.msra.mxu0 0.0
        %746 = vmatpush.msra.mxu0 0.0
        %747 = vmatpush.msra.mxu0 0.0
        %748 = vmatpush.msra.mxu0 0.0
        %749 = vmatpush.msra.mxu0 0.0
        %750 = vmatpush.msra.mxu0 0.0
        %751 = vmatpush.msra.mxu0 0.0
        %752 = vmatpush.msra.mxu0 %v733
        %753 = vmatpush.msra.mxu0 %v732
        %754 = vmatpush.msra.mxu0 %v731
        %755 = vmatpush.msra.mxu0 %v730
        %756 = vmatpush.msra.mxu0 %v729
        %757 = vmatpush.msra.mxu0 %v728
        %758 = vmatmul.f32.gmra.mxu0 %v737
        %v759 = vpop.f32.mrf.mxu0
        %v760 = vadd.f32 0.0, %v759
        %761 = vmatmul.f32.gmra.mxu0 %v740
        %v762 = vpop.f32.mrf.mxu0
        %v763 = vadd.f32 0.0, %v762
        %764 = vdwg.mxu0
        %767 = vrot.lane.b32.xlu0 %v760, 80
        %v768 = vpop.permute.xlu0 %767
        %769 = vrot.lane.b32.xlu0 %v763, 80
        %v770 = vpop.permute.xlu0 %769
        %773 = vxpose.xlu0.b32.start [1/16] %v768, 128
        %774 = vxpose.xlu0.b32.cont [2/16] %v770, 128
        %775 = vxpose.xlu0.b32.cont [3/16] 0.0, 128
        %776 = vxpose.xlu0.b32.cont [4/16] 0.0, 128
        %777 = vxpose.xlu0.b32.cont [5/16] 0.0, 128
        %778 = vxpose.xlu0.b32.cont [6/16] 0.0, 128
        %779 = vxpose.xlu0.b32.cont [7/16] 0.0, 128
        %780 = vxpose.xlu0.b32.cont [8/16] 0.0, 128
        %781 = vxpose.xlu0.b32.cont [9/16] 0.0, 128
        %782 = vxpose.xlu0.b32.cont [10/16] 0.0, 128
        %783 = vxpose.xlu0.b32.cont [11/16] 0.0, 128
        %784 = vxpose.xlu0.b32.cont [12/16] 0.0, 128
        %785 = vxpose.xlu0.b32.cont [13/16] 0.0, 128
        %786 = vxpose.xlu0.b32.cont [14/16] 0.0, 128
        %787 = vxpose.xlu0.b32.cont [15/16] 0.0, 128
        %788 = vxpose.xlu0.b32.end [16/16] 0.0, 128
        %v789 = vpop.trf.xlu0
        %v790 = vpop.trf.xlu0
        %v791 = vpop.trf.xlu0
        %v792 = vpop.trf.xlu0
        %v793 = vpop.trf.xlu0
        %v794 = vpop.trf.xlu0
        %v795 = vpop.trf.xlu0
        %v796 = vpop.trf.xlu0
        %v797 = vpop.trf.xlu0
        %v798 = vpop.trf.xlu0
        %v799 = vpop.trf.xlu0
        %v800 = vpop.trf.xlu0
        %v801 = vpop.trf.xlu0
        %v802 = vpop.trf.xlu0
        %v803 = vpop.trf.xlu0
        %v804 = vpop.trf.xlu0
        %805 = vset.pattern.permute.xlu0 48
        %806 = vperm.xlu0 %805, %v760
        %v807 = vpop.permute.xlu0 %806
        %809 = vset.pattern.permute.xlu0 48
        %810 = vperm.xlu0 %809, %v763
        %v811 = vpop.permute.xlu0 %810
        %v813 = vperm.slane %v789, 3
        %v814 = vadd.f32 %v807, %v813
        %v815 = vadd.f32 %v811, %v813
        %vm816 = vcmp.gt.f32.partialorder %v814, 0.0
        %vm817 = vcmp.gt.f32.partialorder %v815, 0.0
        %v818 = vmul.f32 %v814, 0.2
        %v819 = vmul.f32 %v815, 0.2
        %v820 = vsel %vm816, %v814, %v818
        %v821 = vsel %vm817, %v815, %v819
        %v822 = vsel %vm417, %v820, -1e+30
        %v823 = vsel %vm418, %v821, -1e+30
        %v824 = vsel %vm330, %v822, -inf
        %825 = vmax.xlane.f32.xlu0 %v824
        %v826 = vpop.xlane.xlu0 %825
        %v827 = vsel %vm330, %v823, -inf
        %828 = vmax.xlane.f32.xlu0 %v827
        %v829 = vpop.xlane.xlu0 %828
        %v830 = vsub.f32 %v822, %v826
        %v831 = vsub.f32 %v823, %v829
        %v832 = vmul.f32 %v830, 1.442695
        %v833 = vpow.pop %v832
        %v834 = vmul.f32 %v831, 1.442695
        %v835 = vpow.pop %v834
        %v836 = vsel %vm330, %v833, 0.0
        %837 = vadd.xlane.f32.xlu0 %v836
        %v838 = vpop.xlane.xlu0 %837
        %v839 = vsel %vm330, %v835, 0.0
        %840 = vadd.xlane.f32.xlu0 %v839
        %v841 = vpop.xlane.xlu0 %840
        %v842 = vrcp.pop %v838
        %v843 = vmul.f32 %v838, %v842
        %v844 = vsub.f32 1.0, %v843
        %v845 = vmul.f32 %v842, %v844
        %v846 = vadd.f32 %v842, %v845
        %vm847 = vweird.f32 %v838
        %vm848 = vweird.f32 %v842
        %vm849 = vmor %vm847, %vm848
        %v850 = vsel %vm849, %v842, %v846
        %v851 = vand.u32 2147483647, %v838
        %vm852 = vcmp.eq.f32.partialorder %v851, 8.507059e+37
        %v853 = vand.u32 %v838, 2147483648
        %v854 = vor.u32 1.1754944e-38, %v853
        %v855 = vsel %vm852, %v854, %v850
        %v856 = vmul.f32 %v833, %v855
        %v857 = vrcp.pop %v841
        %v858 = vmul.f32 %v841, %v857
        %v859 = vsub.f32 1.0, %v858
        %v860 = vmul.f32 %v857, %v859
        %v861 = vadd.f32 %v857, %v860
        %vm862 = vweird.f32 %v841
        %vm863 = vweird.f32 %v857
        %vm864 = vmor %vm862, %vm863
        %v865 = vsel %vm864, %v857, %v861
        %v866 = vand.u32 2147483647, %v841
        %vm867 = vcmp.eq.f32.partialorder %v866, 8.507059e+37
        %v868 = vand.u32 %v841, 2147483648
        %v869 = vor.u32 1.1754944e-38, %v868
        %v870 = vsel %vm867, %v869, %v865
        %v871 = vmul.f32 %v835, %v870
        %v873 = vsel %vm330, %v856, 0
        %v876 = vsel %vm330, %v871, 0
        %878 = vmatpush.msra.mxu0 0.0
        %879 = vmatpush.msra.mxu0 0.0
        %880 = vmatpush.msra.mxu0 0.0
        %881 = vmatpush.msra.mxu0 0.0
        %882 = vmatpush.msra.mxu0 0.0
        %883 = vmatpush.msra.mxu0 0.0
        %884 = vmatpush.msra.mxu0 0.0
        %885 = vmatpush.msra.mxu0 0.0
        %886 = vmatpush.msra.mxu0 0.0
        %887 = vmatpush.msra.mxu0 0.0
        %888 = vmatpush.msra.mxu0 0.0
        %889 = vmatpush.msra.mxu0 0.0
        %890 = vmatpush.msra.mxu0 0.0
        %891 = vmatpush.msra.mxu0 0.0
        %892 = vmatpush.msra.mxu0 %v763
        %893 = vmatpush.msra.mxu0 %v760
        %894 = vmatmul.f32.gmra.mxu0 %v873
        %v895 = vpop.f32.mrf.mxu0
        %v896 = vadd.f32 0.0, %v895
        %897 = vmatmul.f32.gmra.mxu0 %v876
        %v898 = vpop.f32.mrf.mxu0
        %v899 = vadd.f32 0.0, %v898
        %900 = vdwg.mxu0
        %901 = vset.pattern.permute.xlu0 49
        %902 = vperm.xlu0 %901, %v760
        %v903 = vpop.permute.xlu0 %902
        %905 = vset.pattern.permute.xlu0 49
        %906 = vperm.xlu0 %905, %v763
        %v907 = vpop.permute.xlu0 %906
        %v909 = vperm.slane %v789, 4
        %v910 = vadd.f32 %v903, %v909
        %v911 = vadd.f32 %v907, %v909
        %vm912 = vcmp.gt.f32.partialorder %v910, 0.0
        %vm913 = vcmp.gt.f32.partialorder %v911, 0.0
        %v914 = vmul.f32 %v910, 0.2
        %v915 = vmul.f32 %v911, 0.2
        %v916 = vsel %vm912, %v910, %v914
        %v917 = vsel %vm913, %v911, %v915
        %v918 = vsel %vm417, %v916, -1e+30
        %v919 = vsel %vm418, %v917, -1e+30
        %v920 = vsel %vm330, %v918, -inf
        %921 = vmax.xlane.f32.xlu0 %v920
        %v922 = vpop.xlane.xlu0 %921
        %v923 = vsel %vm330, %v919, -inf
        %924 = vmax.xlane.f32.xlu0 %v923
        %v925 = vpop.xlane.xlu0 %924
        %v926 = vsub.f32 %v918, %v922
        %v927 = vsub.f32 %v919, %v925
        %v928 = vmul.f32 %v926, 1.442695
        %v929 = vpow.pop %v928
        %v930 = vmul.f32 %v927, 1.442695
        %v931 = vpow.pop %v930
        %v932 = vsel %vm330, %v929, 0.0
        %933 = vadd.xlane.f32.xlu0 %v932
        %v934 = vpop.xlane.xlu0 %933
        %v935 = vsel %vm330, %v931, 0.0
        %936 = vadd.xlane.f32.xlu0 %v935
        %v937 = vpop.xlane.xlu0 %936
        %v938 = vrcp.pop %v934
        %v939 = vmul.f32 %v934, %v938
        %v940 = vsub.f32 1.0, %v939
        %v941 = vmul.f32 %v938, %v940
        %v942 = vadd.f32 %v938, %v941
        %vm943 = vweird.f32 %v934
        %vm944 = vweird.f32 %v938
        %vm945 = vmor %vm943, %vm944
        %v946 = vsel %vm945, %v938, %v942
        %v947 = vand.u32 2147483647, %v934
        %vm948 = vcmp.eq.f32.partialorder %v947, 8.507059e+37
        %v949 = vand.u32 %v934, 2147483648
        %v950 = vor.u32 1.1754944e-38, %v949
        %v951 = vsel %vm948, %v950, %v946
        %v952 = vmul.f32 %v929, %v951
        %v953 = vrcp.pop %v937
        %v954 = vmul.f32 %v937, %v953
        %v955 = vsub.f32 1.0, %v954
        %v956 = vmul.f32 %v953, %v955
        %v957 = vadd.f32 %v953, %v956
        %vm958 = vweird.f32 %v937
        %vm959 = vweird.f32 %v953
        %vm960 = vmor %vm958, %vm959
        %v961 = vsel %vm960, %v953, %v957
        %v962 = vand.u32 2147483647, %v937
        %vm963 = vcmp.eq.f32.partialorder %v962, 8.507059e+37
        %v964 = vand.u32 %v937, 2147483648
        %v965 = vor.u32 1.1754944e-38, %v964
        %v966 = vsel %vm963, %v965, %v961
        %v967 = vmul.f32 %v931, %v966
        %968 = vrot.lane.b32.xlu0 %v760, 112
        %v969 = vpop.permute.xlu0 %968
        %970 = vrot.lane.b32.xlu0 %v763, 112
        %v971 = vpop.permute.xlu0 %970
        %v975 = vsel %vm330, %v952, 0
        %v978 = vsel %vm330, %v967, 0
        %980 = vmatpush.msra.mxu0 0.0
        %981 = vmatpush.msra.mxu0 0.0
        %982 = vmatpush.msra.mxu0 0.0
        %983 = vmatpush.msra.mxu0 0.0
        %984 = vmatpush.msra.mxu0 0.0
        %985 = vmatpush.msra.mxu0 0.0
        %986 = vmatpush.msra.mxu0 0.0
        %987 = vmatpush.msra.mxu0 0.0
        %988 = vmatpush.msra.mxu0 0.0
        %989 = vmatpush.msra.mxu0 0.0
        %990 = vmatpush.msra.mxu0 0.0
        %991 = vmatpush.msra.mxu0 0.0
        %992 = vmatpush.msra.mxu0 0.0
        %993 = vmatpush.msra.mxu0 0.0
        %994 = vmatpush.msra.mxu0 %v971
        %995 = vmatpush.msra.mxu0 %v969
        %996 = vmatmul.f32.gmra.mxu0 %v975
        %v997 = vpop.f32.mrf.mxu0
        %v998 = vadd.f32 0.0, %v997
        %999 = vmatmul.f32.gmra.mxu0 %v978
        %v1000 = vpop.f32.mrf.mxu0
        %v1001 = vadd.f32 0.0, %v1000
        %1002 = vdwg.mxu0
        %1003 = vset.pattern.permute.xlu0 50
        %1004 = vperm.xlu0 %1003, %v760
        %v1005 = vpop.permute.xlu0 %1004
        %1007 = vset.pattern.permute.xlu0 50
        %1008 = vperm.xlu0 %1007, %v763
        %v1009 = vpop.permute.xlu0 %1008
        %v1011 = vperm.slane %v789, 5
        %v1012 = vadd.f32 %v1005, %v1011
        %v1013 = vadd.f32 %v1009, %v1011
        %vm1014 = vcmp.gt.f32.partialorder %v1012, 0.0
        %vm1015 = vcmp.gt.f32.partialorder %v1013, 0.0
        %v1016 = vmul.f32 %v1012, 0.2
        %v1017 = vmul.f32 %v1013, 0.2
        %v1018 = vsel %vm1014, %v1012, %v1016
        %v1019 = vsel %vm1015, %v1013, %v1017
        %v1020 = vsel %vm417, %v1018, -1e+30
        %v1021 = vsel %vm418, %v1019, -1e+30
        %v1022 = vsel %vm330, %v1020, -inf
        %1023 = vmax.xlane.f32.xlu0 %v1022
        %v1024 = vpop.xlane.xlu0 %1023
        %v1025 = vsel %vm330, %v1021, -inf
        %1026 = vmax.xlane.f32.xlu0 %v1025
        %v1027 = vpop.xlane.xlu0 %1026
        %v1028 = vsub.f32 %v1020, %v1024
        %v1029 = vsub.f32 %v1021, %v1027
        %v1030 = vmul.f32 %v1028, 1.442695
        %v1031 = vpow.pop %v1030
        %v1032 = vmul.f32 %v1029, 1.442695
        %v1033 = vpow.pop %v1032
        %v1034 = vsel %vm330, %v1031, 0.0
        %1035 = vadd.xlane.f32.xlu0 %v1034
        %v1036 = vpop.xlane.xlu0 %1035
        %v1037 = vsel %vm330, %v1033, 0.0
        %1038 = vadd.xlane.f32.xlu0 %v1037
        %v1039 = vpop.xlane.xlu0 %1038
        %v1040 = vrcp.pop %v1036
        %v1041 = vmul.f32 %v1036, %v1040
        %v1042 = vsub.f32 1.0, %v1041
        %v1043 = vmul.f32 %v1040, %v1042
        %v1044 = vadd.f32 %v1040, %v1043
        %vm1045 = vweird.f32 %v1036
        %vm1046 = vweird.f32 %v1040
        %vm1047 = vmor %vm1045, %vm1046
        %v1048 = vsel %vm1047, %v1040, %v1044
        %v1049 = vand.u32 2147483647, %v1036
        %vm1050 = vcmp.eq.f32.partialorder %v1049, 8.507059e+37
        %v1051 = vand.u32 %v1036, 2147483648
        %v1052 = vor.u32 1.1754944e-38, %v1051
        %v1053 = vsel %vm1050, %v1052, %v1048
        %v1054 = vmul.f32 %v1031, %v1053
        %v1055 = vrcp.pop %v1039
        %v1056 = vmul.f32 %v1039, %v1055
        %v1057 = vsub.f32 1.0, %v1056
        %v1058 = vmul.f32 %v1055, %v1057
        %v1059 = vadd.f32 %v1055, %v1058
        %vm1060 = vweird.f32 %v1039
        %vm1061 = vweird.f32 %v1055
        %vm1062 = vmor %vm1060, %vm1061
        %v1063 = vsel %vm1062, %v1055, %v1059
        %v1064 = vand.u32 2147483647, %v1039
        %vm1065 = vcmp.eq.f32.partialorder %v1064, 8.507059e+37
        %v1066 = vand.u32 %v1039, 2147483648
        %v1067 = vor.u32 1.1754944e-38, %v1066
        %v1068 = vsel %vm1065, %v1067, %v1063
        %v1069 = vmul.f32 %v1033, %v1068
        %1070 = vrot.lane.b32.xlu0 %v760, 96
        %v1071 = vpop.permute.xlu0 %1070
        %1072 = vrot.lane.b32.xlu0 %v763, 96
        %v1073 = vpop.permute.xlu0 %1072
        %v1077 = vsel %vm330, %v1054, 0
        %v1080 = vsel %vm330, %v1069, 0
        %1082 = vmatpush.msra.mxu0 0.0
        %1083 = vmatpush.msra.mxu0 0.0
        %1084 = vmatpush.msra.mxu0 0.0
        %1085 = vmatpush.msra.mxu0 0.0
        %1086 = vmatpush.msra.mxu0 0.0
        %1087 = vmatpush.msra.mxu0 0.0
        %1088 = vmatpush.msra.mxu0 0.0
        %1089 = vmatpush.msra.mxu0 0.0
        %1090 = vmatpush.msra.mxu0 0.0
        %1091 = vmatpush.msra.mxu0 0.0
        %1092 = vmatpush.msra.mxu0 0.0
        %1093 = vmatpush.msra.mxu0 0.0
        %1094 = vmatpush.msra.mxu0 0.0
        %1095 = vmatpush.msra.mxu0 0.0
        %1096 = vmatpush.msra.mxu0 %v1073
        %1097 = vmatpush.msra.mxu0 %v1071
        %1098 = vmatmul.f32.gmra.mxu0 %v1077
        %v1099 = vpop.f32.mrf.mxu0
        %v1100 = vadd.f32 0.0, %v1099
        %1101 = vmatmul.f32.gmra.mxu0 %v1080
        %v1102 = vpop.f32.mrf.mxu0
        %v1103 = vadd.f32 0.0, %v1102
        %1104 = vdwg.mxu0
        %1107 = vrot.lane.b32.xlu0 %v998, 16
        %v1108 = vpop.permute.xlu0 %1107
        %1109 = vrot.lane.b32.xlu0 %v1001, 16
        %v1110 = vpop.permute.xlu0 %1109
        %1115 = vrot.lane.b32.xlu0 %v1100, 32
        %v1116 = vpop.permute.xlu0 %1115
        %1117 = vrot.lane.b32.xlu0 %v1103, 32
        %v1118 = vpop.permute.xlu0 %1117
        %v1121 = vsel %vm330, %v896, %v1108
        %v1122 = vsel %vm330, %v899, %v1110
        %v1123 = vsel %vm295, %v1121, %v1116
        %v1124 = vsel %vm295, %v1122, %v1118
        %v1125 = vperm.slane %v734, 0
        %v1126 = vmul.f32 %v1123, %v1125
        %v1127 = vmul.f32 %v1124, %v1125
        %v1128 = vperm.slane %v734, 1
        %v1129 = vadd.f32 %v1126, %v1128
        %v1130 = vadd.f32 %v1127, %v1128
        %v1131 = vld [vmem:[#allocation2 + $0x88] sm:$0xff]
        %v1132 = vld [vmem:[#allocation2 + $0x90] sm:$0xff]
        %v1133 = vld [vmem:[#allocation2 + $0x98] sm:$0xff]
        %v1134 = vld [vmem:[#allocation2 + $0xa0] sm:$0xff]
        %v1135 = vld [vmem:[#allocation2 + $0xa8] sm:$0xff]
        %v1136 = vld [vmem:[#allocation2 + $0xb0] sm:$0xff]
        %v1137 = vld [vmem:[#allocation2 + $0xb8] sm:$0x3]
        %v1139 = vsel %vm735, %v1129, 0
        %v1142 = vsel %vm735, %v1130, 0
        %1144 = vmatpush.msra.mxu0 0.0
        %1145 = vmatpush.msra.mxu0 0.0
        %1146 = vmatpush.msra.mxu0 0.0
        %1147 = vmatpush.msra.mxu0 0.0
        %1148 = vmatpush.msra.mxu0 0.0
        %1149 = vmatpush.msra.mxu0 0.0
        %1150 = vmatpush.msra.mxu0 0.0
        %1151 = vmatpush.msra.mxu0 0.0
        %1152 = vmatpush.msra.mxu0 0.0
        %1153 = vmatpush.msra.mxu0 0.0
        %1154 = vmatpush.msra.mxu0 %v1136
        %1155 = vmatpush.msra.mxu0 %v1135
        %1156 = vmatpush.msra.mxu0 %v1134
        %1157 = vmatpush.msra.mxu0 %v1133
        %1158 = vmatpush.msra.mxu0 %v1132
        %1159 = vmatpush.msra.mxu0 %v1131
        %1160 = vmatmul.f32.gmra.mxu0 %v1139
        %v1161 = vpop.f32.mrf.mxu0
        %v1162 = vadd.f32 0.0, %v1161
        %1163 = vmatmul.f32.gmra.mxu0 %v1142
        %v1164 = vpop.f32.mrf.mxu0
        %v1165 = vadd.f32 0.0, %v1164
        %1166 = vdwg.mxu0
        %1169 = vrot.lane.b32.xlu0 %v1162, 80
        %v1170 = vpop.permute.xlu0 %1169
        %1171 = vrot.lane.b32.xlu0 %v1165, 80
        %v1172 = vpop.permute.xlu0 %1171
        %1175 = vxpose.xlu0.b32.start [1/16] %v1170, 128
        %1176 = vxpose.xlu0.b32.cont [2/16] %v1172, 128
        %1177 = vxpose.xlu0.b32.cont [3/16] 0.0, 128
        %1178 = vxpose.xlu0.b32.cont [4/16] 0.0, 128
        %1179 = vxpose.xlu0.b32.cont [5/16] 0.0, 128
        %1180 = vxpose.xlu0.b32.cont [6/16] 0.0, 128
        %1181 = vxpose.xlu0.b32.cont [7/16] 0.0, 128
        %1182 = vxpose.xlu0.b32.cont [8/16] 0.0, 128
        %1183 = vxpose.xlu0.b32.cont [9/16] 0.0, 128
        %1184 = vxpose.xlu0.b32.cont [10/16] 0.0, 128
        %1185 = vxpose.xlu0.b32.cont [11/16] 0.0, 128
        %1186 = vxpose.xlu0.b32.cont [12/16] 0.0, 128
        %1187 = vxpose.xlu0.b32.cont [13/16] 0.0, 128
        %1188 = vxpose.xlu0.b32.cont [14/16] 0.0, 128
        %1189 = vxpose.xlu0.b32.cont [15/16] 0.0, 128
        %1190 = vxpose.xlu0.b32.end [16/16] 0.0, 128
        %v1191 = vpop.trf.xlu0
        %v1192 = vpop.trf.xlu0
        %v1193 = vpop.trf.xlu0
        %v1194 = vpop.trf.xlu0
        %v1195 = vpop.trf.xlu0
        %v1196 = vpop.trf.xlu0
        %v1197 = vpop.trf.xlu0
        %v1198 = vpop.trf.xlu0
        %v1199 = vpop.trf.xlu0
        %v1200 = vpop.trf.xlu0
        %v1201 = vpop.trf.xlu0
        %v1202 = vpop.trf.xlu0
        %v1203 = vpop.trf.xlu0
        %v1204 = vpop.trf.xlu0
        %v1205 = vpop.trf.xlu0
        %v1206 = vpop.trf.xlu0
        %1207 = vset.pattern.permute.xlu0 48
        %1208 = vperm.xlu0 %1207, %v1162
        %v1209 = vpop.permute.xlu0 %1208
        %1211 = vset.pattern.permute.xlu0 48
        %1212 = vperm.xlu0 %1211, %v1165
        %v1213 = vpop.permute.xlu0 %1212
        %v1215 = vperm.slane %v1191, 3
        %v1216 = vadd.f32 %v1209, %v1215
        %v1217 = vadd.f32 %v1213, %v1215
        %vm1218 = vcmp.gt.f32.partialorder %v1216, 0.0
        %vm1219 = vcmp.gt.f32.partialorder %v1217, 0.0
        %v1220 = vmul.f32 %v1216, 0.2
        %v1221 = vmul.f32 %v1217, 0.2
        %v1222 = vsel %vm1218, %v1216, %v1220
        %v1223 = vsel %vm1219, %v1217, %v1221
        %v1224 = vsel %vm417, %v1222, -1e+30
        %v1225 = vsel %vm418, %v1223, -1e+30
        %v1226 = vsel %vm330, %v1224, -inf
        %1227 = vmax.xlane.f32.xlu0 %v1226
        %v1228 = vpop.xlane.xlu0 %1227
        %v1229 = vsel %vm330, %v1225, -inf
        %1230 = vmax.xlane.f32.xlu0 %v1229
        %v1231 = vpop.xlane.xlu0 %1230
        %v1232 = vsub.f32 %v1224, %v1228
        %v1233 = vsub.f32 %v1225, %v1231
        %v1234 = vmul.f32 %v1232, 1.442695
        %v1235 = vpow.pop %v1234
        %v1236 = vmul.f32 %v1233, 1.442695
        %v1237 = vpow.pop %v1236
        %v1238 = vsel %vm330, %v1235, 0.0
        %1239 = vadd.xlane.f32.xlu0 %v1238
        %v1240 = vpop.xlane.xlu0 %1239
        %v1241 = vsel %vm330, %v1237, 0.0
        %1242 = vadd.xlane.f32.xlu0 %v1241
        %v1243 = vpop.xlane.xlu0 %1242
        %v1244 = vrcp.pop %v1240
        %v1245 = vmul.f32 %v1240, %v1244
        %v1246 = vsub.f32 1.0, %v1245
        %v1247 = vmul.f32 %v1244, %v1246
        %v1248 = vadd.f32 %v1244, %v1247
        %vm1249 = vweird.f32 %v1240
        %vm1250 = vweird.f32 %v1244
        %vm1251 = vmor %vm1249, %vm1250
        %v1252 = vsel %vm1251, %v1244, %v1248
        %v1253 = vand.u32 2147483647, %v1240
        %vm1254 = vcmp.eq.f32.partialorder %v1253, 8.507059e+37
        %v1255 = vand.u32 %v1240, 2147483648
        %v1256 = vor.u32 1.1754944e-38, %v1255
        %v1257 = vsel %vm1254, %v1256, %v1252
        %v1258 = vmul.f32 %v1235, %v1257
        %v1259 = vrcp.pop %v1243
        %v1260 = vmul.f32 %v1243, %v1259
        %v1261 = vsub.f32 1.0, %v1260
        %v1262 = vmul.f32 %v1259, %v1261
        %v1263 = vadd.f32 %v1259, %v1262
        %vm1264 = vweird.f32 %v1243
        %vm1265 = vweird.f32 %v1259
        %vm1266 = vmor %vm1264, %vm1265
        %v1267 = vsel %vm1266, %v1259, %v1263
        %v1268 = vand.u32 2147483647, %v1243
        %vm1269 = vcmp.eq.f32.partialorder %v1268, 8.507059e+37
        %v1270 = vand.u32 %v1243, 2147483648
        %v1271 = vor.u32 1.1754944e-38, %v1270
        %v1272 = vsel %vm1269, %v1271, %v1267
        %v1273 = vmul.f32 %v1237, %v1272
        %v1275 = vsel %vm330, %v1258, 0
        %v1278 = vsel %vm330, %v1273, 0
        %1280 = vmatpush.msra.mxu0 0.0
        %1281 = vmatpush.msra.mxu0 0.0
        %1282 = vmatpush.msra.mxu0 0.0
        %1283 = vmatpush.msra.mxu0 0.0
        %1284 = vmatpush.msra.mxu0 0.0
        %1285 = vmatpush.msra.mxu0 0.0
        %1286 = vmatpush.msra.mxu0 0.0
        %1287 = vmatpush.msra.mxu0 0.0
        %1288 = vmatpush.msra.mxu0 0.0
        %1289 = vmatpush.msra.mxu0 0.0
        %1290 = vmatpush.msra.mxu0 0.0
        %1291 = vmatpush.msra.mxu0 0.0
        %1292 = vmatpush.msra.mxu0 0.0
        %1293 = vmatpush.msra.mxu0 0.0
        %1294 = vmatpush.msra.mxu0 %v1165
        %1295 = vmatpush.msra.mxu0 %v1162
        %1296 = vmatmul.f32.gmra.mxu0 %v1275
        %v1297 = vpop.f32.mrf.mxu0
        %v1298 = vadd.f32 0.0, %v1297
        %1299 = vmatmul.f32.gmra.mxu0 %v1278
        %v1300 = vpop.f32.mrf.mxu0
        %v1301 = vadd.f32 0.0, %v1300
        %1302 = vdwg.mxu0
        %1303 = vset.pattern.permute.xlu0 49
        %1304 = vperm.xlu0 %1303, %v1162
        %v1305 = vpop.permute.xlu0 %1304
        %1307 = vset.pattern.permute.xlu0 49
        %1308 = vperm.xlu0 %1307, %v1165
        %v1309 = vpop.permute.xlu0 %1308
        %v1311 = vperm.slane %v1191, 4
        %v1312 = vadd.f32 %v1305, %v1311
        %v1313 = vadd.f32 %v1309, %v1311
        %vm1314 = vcmp.gt.f32.partialorder %v1312, 0.0
        %vm1315 = vcmp.gt.f32.partialorder %v1313, 0.0
        %v1316 = vmul.f32 %v1312, 0.2
        %v1317 = vmul.f32 %v1313, 0.2
        %v1318 = vsel %vm1314, %v1312, %v1316
        %v1319 = vsel %vm1315, %v1313, %v1317
        %v1320 = vsel %vm417, %v1318, -1e+30
        %v1321 = vsel %vm418, %v1319, -1e+30
        %v1322 = vsel %vm330, %v1320, -inf
        %1323 = vmax.xlane.f32.xlu0 %v1322
        %v1324 = vpop.xlane.xlu0 %1323
        %v1325 = vsel %vm330, %v1321, -inf
        %1326 = vmax.xlane.f32.xlu0 %v1325
        %v1327 = vpop.xlane.xlu0 %1326
        %v1328 = vsub.f32 %v1320, %v1324
        %v1329 = vsub.f32 %v1321, %v1327
        %v1330 = vmul.f32 %v1328, 1.442695
        %v1331 = vpow.pop %v1330
        %v1332 = vmul.f32 %v1329, 1.442695
        %v1333 = vpow.pop %v1332
        %v1334 = vsel %vm330, %v1331, 0.0
        %1335 = vadd.xlane.f32.xlu0 %v1334
        %v1336 = vpop.xlane.xlu0 %1335
        %v1337 = vsel %vm330, %v1333, 0.0
        %1338 = vadd.xlane.f32.xlu0 %v1337
        %v1339 = vpop.xlane.xlu0 %1338
        %v1340 = vrcp.pop %v1336
        %v1341 = vmul.f32 %v1336, %v1340
        %v1342 = vsub.f32 1.0, %v1341
        %v1343 = vmul.f32 %v1340, %v1342
        %v1344 = vadd.f32 %v1340, %v1343
        %vm1345 = vweird.f32 %v1336
        %vm1346 = vweird.f32 %v1340
        %vm1347 = vmor %vm1345, %vm1346
        %v1348 = vsel %vm1347, %v1340, %v1344
        %v1349 = vand.u32 2147483647, %v1336
        %vm1350 = vcmp.eq.f32.partialorder %v1349, 8.507059e+37
        %v1351 = vand.u32 %v1336, 2147483648
        %v1352 = vor.u32 1.1754944e-38, %v1351
        %v1353 = vsel %vm1350, %v1352, %v1348
        %v1354 = vmul.f32 %v1331, %v1353
        %v1355 = vrcp.pop %v1339
        %v1356 = vmul.f32 %v1339, %v1355
        %v1357 = vsub.f32 1.0, %v1356
        %v1358 = vmul.f32 %v1355, %v1357
        %v1359 = vadd.f32 %v1355, %v1358
        %vm1360 = vweird.f32 %v1339
        %vm1361 = vweird.f32 %v1355
        %vm1362 = vmor %vm1360, %vm1361
        %v1363 = vsel %vm1362, %v1355, %v1359
        %v1364 = vand.u32 2147483647, %v1339
        %vm1365 = vcmp.eq.f32.partialorder %v1364, 8.507059e+37
        %v1366 = vand.u32 %v1339, 2147483648
        %v1367 = vor.u32 1.1754944e-38, %v1366
        %v1368 = vsel %vm1365, %v1367, %v1363
        %v1369 = vmul.f32 %v1333, %v1368
        %1370 = vrot.lane.b32.xlu0 %v1162, 112
        %v1371 = vpop.permute.xlu0 %1370
        %1372 = vrot.lane.b32.xlu0 %v1165, 112
        %v1373 = vpop.permute.xlu0 %1372
        %v1377 = vsel %vm330, %v1354, 0
        %v1380 = vsel %vm330, %v1369, 0
        %1382 = vmatpush.msra.mxu0 0.0
        %1383 = vmatpush.msra.mxu0 0.0
        %1384 = vmatpush.msra.mxu0 0.0
        %1385 = vmatpush.msra.mxu0 0.0
        %1386 = vmatpush.msra.mxu0 0.0
        %1387 = vmatpush.msra.mxu0 0.0
        %1388 = vmatpush.msra.mxu0 0.0
        %1389 = vmatpush.msra.mxu0 0.0
        %1390 = vmatpush.msra.mxu0 0.0
        %1391 = vmatpush.msra.mxu0 0.0
        %1392 = vmatpush.msra.mxu0 0.0
        %1393 = vmatpush.msra.mxu0 0.0
        %1394 = vmatpush.msra.mxu0 0.0
        %1395 = vmatpush.msra.mxu0 0.0
        %1396 = vmatpush.msra.mxu0 %v1373
        %1397 = vmatpush.msra.mxu0 %v1371
        %1398 = vmatmul.f32.gmra.mxu0 %v1377
        %v1399 = vpop.f32.mrf.mxu0
        %v1400 = vadd.f32 0.0, %v1399
        %1401 = vmatmul.f32.gmra.mxu0 %v1380
        %v1402 = vpop.f32.mrf.mxu0
        %v1403 = vadd.f32 0.0, %v1402
        %1404 = vdwg.mxu0
        %1405 = vset.pattern.permute.xlu0 50
        %1406 = vperm.xlu0 %1405, %v1162
        %v1407 = vpop.permute.xlu0 %1406
        %1409 = vset.pattern.permute.xlu0 50
        %1410 = vperm.xlu0 %1409, %v1165
        %v1411 = vpop.permute.xlu0 %1410
        %v1413 = vperm.slane %v1191, 5
        %v1414 = vadd.f32 %v1407, %v1413
        %v1415 = vadd.f32 %v1411, %v1413
        %vm1416 = vcmp.gt.f32.partialorder %v1414, 0.0
        %vm1417 = vcmp.gt.f32.partialorder %v1415, 0.0
        %v1418 = vmul.f32 %v1414, 0.2
        %v1419 = vmul.f32 %v1415, 0.2
        %v1420 = vsel %vm1416, %v1414, %v1418
        %v1421 = vsel %vm1417, %v1415, %v1419
        %v1422 = vsel %vm417, %v1420, -1e+30
        %v1423 = vsel %vm418, %v1421, -1e+30
        %v1424 = vsel %vm330, %v1422, -inf
        %1425 = vmax.xlane.f32.xlu0 %v1424
        %v1426 = vpop.xlane.xlu0 %1425
        %v1427 = vsel %vm330, %v1423, -inf
        %1428 = vmax.xlane.f32.xlu0 %v1427
        %v1429 = vpop.xlane.xlu0 %1428
        %v1430 = vsub.f32 %v1422, %v1426
        %v1431 = vsub.f32 %v1423, %v1429
        %v1432 = vmul.f32 %v1430, 1.442695
        %v1433 = vpow.pop %v1432
        %v1434 = vmul.f32 %v1431, 1.442695
        %v1435 = vpow.pop %v1434
        %v1436 = vsel %vm330, %v1433, 0.0
        %1437 = vadd.xlane.f32.xlu0 %v1436
        %v1438 = vpop.xlane.xlu0 %1437
        %v1439 = vsel %vm330, %v1435, 0.0
        %1440 = vadd.xlane.f32.xlu0 %v1439
        %v1441 = vpop.xlane.xlu0 %1440
        %v1442 = vrcp.pop %v1438
        %v1443 = vmul.f32 %v1438, %v1442
        %v1444 = vsub.f32 1.0, %v1443
        %v1445 = vmul.f32 %v1442, %v1444
        %v1446 = vadd.f32 %v1442, %v1445
        %vm1447 = vweird.f32 %v1438
        %vm1448 = vweird.f32 %v1442
        %vm1449 = vmor %vm1447, %vm1448
        %v1450 = vsel %vm1449, %v1442, %v1446
        %v1451 = vand.u32 2147483647, %v1438
        %vm1452 = vcmp.eq.f32.partialorder %v1451, 8.507059e+37
        %v1453 = vand.u32 %v1438, 2147483648
        %v1454 = vor.u32 1.1754944e-38, %v1453
        %v1455 = vsel %vm1452, %v1454, %v1450
        %v1456 = vmul.f32 %v1433, %v1455
        %v1457 = vrcp.pop %v1441
        %v1458 = vmul.f32 %v1441, %v1457
        %v1459 = vsub.f32 1.0, %v1458
        %v1460 = vmul.f32 %v1457, %v1459
        %v1461 = vadd.f32 %v1457, %v1460
        %vm1462 = vweird.f32 %v1441
        %vm1463 = vweird.f32 %v1457
        %vm1464 = vmor %vm1462, %vm1463
        %v1465 = vsel %vm1464, %v1457, %v1461
        %v1466 = vand.u32 2147483647, %v1441
        %vm1467 = vcmp.eq.f32.partialorder %v1466, 8.507059e+37
        %v1468 = vand.u32 %v1441, 2147483648
        %v1469 = vor.u32 1.1754944e-38, %v1468
        %v1470 = vsel %vm1467, %v1469, %v1465
        %v1471 = vmul.f32 %v1435, %v1470
        %1472 = vrot.lane.b32.xlu0 %v1162, 96
        %v1473 = vpop.permute.xlu0 %1472
        %1474 = vrot.lane.b32.xlu0 %v1165, 96
        %v1475 = vpop.permute.xlu0 %1474
        %v1479 = vsel %vm330, %v1456, 0
        %v1482 = vsel %vm330, %v1471, 0
        %1484 = vmatpush.msra.mxu0 0.0
        %1485 = vmatpush.msra.mxu0 0.0
        %1486 = vmatpush.msra.mxu0 0.0
        %1487 = vmatpush.msra.mxu0 0.0
        %1488 = vmatpush.msra.mxu0 0.0
        %1489 = vmatpush.msra.mxu0 0.0
        %1490 = vmatpush.msra.mxu0 0.0
        %1491 = vmatpush.msra.mxu0 0.0
        %1492 = vmatpush.msra.mxu0 0.0
        %1493 = vmatpush.msra.mxu0 0.0
        %1494 = vmatpush.msra.mxu0 0.0
        %1495 = vmatpush.msra.mxu0 0.0
        %1496 = vmatpush.msra.mxu0 0.0
        %1497 = vmatpush.msra.mxu0 0.0
        %1498 = vmatpush.msra.mxu0 %v1475
        %1499 = vmatpush.msra.mxu0 %v1473
        %1500 = vmatmul.f32.gmra.mxu0 %v1479
        %v1501 = vpop.f32.mrf.mxu0
        %v1502 = vadd.f32 0.0, %v1501
        %1503 = vmatmul.f32.gmra.mxu0 %v1482
        %v1504 = vpop.f32.mrf.mxu0
        %v1505 = vadd.f32 0.0, %v1504
        %1506 = vdwg.mxu0
        %1509 = vrot.lane.b32.xlu0 %v1400, 16
        %v1510 = vpop.permute.xlu0 %1509
        %1511 = vrot.lane.b32.xlu0 %v1403, 16
        %v1512 = vpop.permute.xlu0 %1511
        %1517 = vrot.lane.b32.xlu0 %v1502, 32
        %v1518 = vpop.permute.xlu0 %1517
        %1519 = vrot.lane.b32.xlu0 %v1505, 32
        %v1520 = vpop.permute.xlu0 %1519
        %v1523 = vsel %vm330, %v1298, %v1510
        %v1524 = vsel %vm330, %v1301, %v1512
        %v1525 = vsel %vm295, %v1523, %v1518
        %v1526 = vsel %vm295, %v1524, %v1520
        %v1527 = vperm.slane %v1137, 0
        %v1528 = vmul.f32 %v1525, %v1527
        %v1529 = vmul.f32 %v1526, %v1527
        %v1530 = vperm.slane %v1137, 1
        %v1531 = vadd.f32 %v1528, %v1530
        %v1532 = vadd.f32 %v1529, %v1530
        %v1533 = vld [vmem:[%s249] sm:$0x3]
        %v1535 = vsel %vm330, %v1533, 0
        %1537 = vmatpush.msra.mxu0 0.0
        %1538 = vmatpush.msra.mxu0 0.0
        %1539 = vmatpush.msra.mxu0 0.0
        %1540 = vmatpush.msra.mxu0 0.0
        %1541 = vmatpush.msra.mxu0 0.0
        %1542 = vmatpush.msra.mxu0 0.0
        %1543 = vmatpush.msra.mxu0 0.0
        %1544 = vmatpush.msra.mxu0 0.0
        %1545 = vmatpush.msra.mxu0 0.0
        %1546 = vmatpush.msra.mxu0 0.0
        %1547 = vmatpush.msra.mxu0 0.0
        %1548 = vmatpush.msra.mxu0 0.0
        %1549 = vmatpush.msra.mxu0 0.0
        %1550 = vmatpush.msra.mxu0 0.0
        %1551 = vmatpush.msra.mxu0 %v1532
        %1552 = vmatpush.msra.mxu0 %v1531
        %1553 = vmatmul.f32.gmra.mxu0 %v1535
        %v1554 = vpop.f32.mrf.mxu0
        %v1555 = vadd.f32 0.0, %v1554
        %1556 = vdwg.mxu0
        %v1557 = vld [vmem:[#allocation2 + $0xc0] sm:$0xff]
        %v1558 = vld [vmem:[#allocation2 + $0xc8] sm:$0xff]
        %v1559 = vld [vmem:[#allocation2 + $0xd0] sm:$0xff]
        %v1560 = vld [vmem:[#allocation2 + $0xd8] sm:$0xff]
        %v1561 = vld [vmem:[#allocation2 + $0xe0] sm:$0xff]
        %v1562 = vld [vmem:[#allocation2 + $0xe8] sm:$0xff]
        %v1563 = vld [vmem:[#allocation2 + $0xf0] sm:$0x1]
        %v1564 = vperm.slane %v1563, 0
        %v1566 = vsel %vm735, %v1555, 0
        %1568 = vmatpush.msra.mxu0 0.0
        %1569 = vmatpush.msra.mxu0 0.0
        %1570 = vmatpush.msra.mxu0 0.0
        %1571 = vmatpush.msra.mxu0 0.0
        %1572 = vmatpush.msra.mxu0 0.0
        %1573 = vmatpush.msra.mxu0 0.0
        %1574 = vmatpush.msra.mxu0 0.0
        %1575 = vmatpush.msra.mxu0 0.0
        %1576 = vmatpush.msra.mxu0 0.0
        %1577 = vmatpush.msra.mxu0 0.0
        %1578 = vmatpush.msra.mxu0 %v1562
        %1579 = vmatpush.msra.mxu0 %v1561
        %1580 = vmatpush.msra.mxu0 %v1560
        %1581 = vmatpush.msra.mxu0 %v1559
        %1582 = vmatpush.msra.mxu0 %v1558
        %1583 = vmatpush.msra.mxu0 %v1557
        %1584 = vmatmul.f32.gmra.mxu0 %v1566
        %v1585 = vpop.f32.mrf.mxu0
        %v1586 = vadd.f32 %v1564, %v1585
        %1587 = vdwg.mxu0
        %v1588 = vmax.f32 %v1586, 0.0
        %v1589 = vld [vmem:[#allocation2 + $0xf8] sm:$0xff]
        %v1590 = vld [vmem:[#allocation2 + $0x100] sm:$0xff]
        %v1591 = vld [vmem:[#allocation2 + $0x108] sm:$0x1]
        %v1592 = vperm.slane %v1591, 0
        %v1594 = vsel %vm330, %v1588, 0
        %1596 = vmatpush.msra.mxu0 0.0
        %1597 = vmatpush.msra.mxu0 0.0
        %1598 = vmatpush.msra.mxu0 0.0
        %1599 = vmatpush.msra.mxu0 0.0
        %1600 = vmatpush.msra.mxu0 0.0
        %1601 = vmatpush.msra.mxu0 0.0
        %1602 = vmatpush.msra.mxu0 0.0
        %1603 = vmatpush.msra.mxu0 0.0
        %1604 = vmatpush.msra.mxu0 0.0
        %1605 = vmatpush.msra.mxu0 0.0
        %1606 = vmatpush.msra.mxu0 0.0
        %1607 = vmatpush.msra.mxu0 0.0
        %1608 = vmatpush.msra.mxu0 0.0
        %1609 = vmatpush.msra.mxu0 0.0
        %1610 = vmatpush.msra.mxu0 %v1590
        %1611 = vmatpush.msra.mxu0 %v1589
        %1612 = vmatmul.f32.gmra.mxu0 %v1594
        %v1613 = vpop.f32.mrf.mxu0
        %v1614 = vadd.f32 %v1592, %v1613
        %1615 = vdwg.mxu0
        %vm1616 = vcmask 25600
        %v1617 = vsel %vm1616, %v1614, -inf
        %1618 = vmax.xlane.f32.xlu0 %v1617
        %v1619 = vpop.xlane.xlu0 %1618
        %v1620 = vsub.f32 %v1614, %v1619
        %v1621 = vmul.f32 %v1620, 1.442695
        %v1622 = vpow.pop %v1621
        %v1623 = vsel %vm1616, %v1622, 0.0
        %1624 = vadd.xlane.f32.xlu0 %v1623
        %v1625 = vpop.xlane.xlu0 %1624
        %v1626 = vlog2.pop %v1625
        %v1627 = vmul.f32 %v1626, 0.6931472
        %v1628 = vsub.f32 %v1620, %v1627
        %1629 = vst.msk [vmem:[%s235] sm:$0x3] %vm1616, %v1628
        %s1630 = sand.u32 %s126, 1
        %s1631 = scalar_lea.sflag [#allocation4], %s1630
        %s1632 = sand.u32 %s126, 1
        %s1633 = smul.addr %s1632, 2
        %s1634 = scalar_lea.vmem [#allocation5], %s1633
        // Predicated region
        $region41: #{tpu_custom_call.1} parent=35 // pred_check
          %p1635 = pneg %p136
        $region42: #{tpu_custom_call.1} parent=35 // pred_check_branch
          %1637 = sbr.rel (%p1635) target = $region44
        $region43: #{tpu_custom_call.1} parent=35 // pred_region
          %1639 = vsyncadd %s1631, 0
          %s1640 = smul.addr %s19, 2
          %s1641 = scalar_lea.hbm %s4, %s1640
          %s1643 = sshll.u32 %s1634, 4
          %s1644 = int_to_ptr.vmem [resolvable:$true] %s1643
          %s1645 = sshll.u32 %s1641, 4
          %s1646 = int_to_ptr.hbm [resolvable:$true] %s1645
          %1648 = dma.vmem_to_hbm [thread:$0]  %s1644, 32, %s1646, %s1631
        $region44: #{tpu_custom_call.1} parent=35 // pred_fallthru
          _
      $region36: #{tpu_custom_call.1} parent=5 // pred_fallthru
        _
      %p1649 = scmp.le.s32.totalorder 2, %s14
      // Predicated region
      $region45: #{tpu_custom_call.1} parent=5 // pred_check
        %p1650 = pneg %p1649
      $region46: #{tpu_custom_call.1} parent=5 // pred_check_branch
        %1652 = sbr.rel (%p1650) target = $region48
      $region47: #{tpu_custom_call.1} parent=5 // pred_region
        %s1653 = ssub.s32 %s14, 2
        // Predicated region
        $region49: #{tpu_custom_call.1} parent=47 // pred_check
          %p1654 = pneg %p142
        $region50: #{tpu_custom_call.1} parent=47 // pred_check_branch
          %1656 = sbr.rel (%p1654) target = $region52
        $region51: #{tpu_custom_call.1} parent=47 // pred_region
          %s1657 = sand.u32 %s127, 1
          %s1658 = scalar_lea.sflag [#allocation4], %s1657
          %s1659 = sand.u32 %s127, 1
          %s1660 = smul.addr %s1659, 2
          %s1661 = scalar_lea.vmem [#allocation5], %s1660
          %1663 = dma.done %s1658, 32
        $region52: #{tpu_custom_call.1} parent=47 // pred_fallthru
          _
      $region48: #{tpu_custom_call.1} parent=5 // pred_fallthru
        _
    $region6: #{tpu_custom_call.1} parent=1 // loop_footer
      %s18 = sadd.s32 1, %s14
    $region7: #{tpu_custom_call.1} parent=1 // loop_footer_branch
      %13 = sbr.rel target = $region3
    $region8: #{tpu_custom_call.1} parent=1 // loop_exit
      _
    %1664 = vsyncpa [#allocation3], 1
    %s1665 = scalar_lea.sflag [#allocation3], 1
    %1666 = vsyncpa %s1665, 1
    %1667 = vsyncpa [#allocation4], 1
    %s1668 = scalar_lea.sflag [#allocation4], 1
    %1669 = vsyncpa %s1668, 1

</llo_original>
